<compile_context>
chip_gen: v7x
topology: tpu7x:2x2x1
jax: 0.10.0
libtpu: 0.0.40
codegen_flags: <defaults>
</compile_context>

<pallas_src>
import functools

import numpy as np

import jax
import jax.numpy as jnp
from jax.experimental import pallas as pl
from jax.experimental.pallas import tpu as pltpu


# MXU input dtype for the conv matmuls.  At production channel counts set this
# to jnp.bfloat16 (MXU is bf16-native on v5e/v6e/v7x, ~3x throughput); at the
# tiny test shapes (C=4/8) the kernel is latency/overhead bound, the MXU runs
# at <3% utilisation, and bf16 rounding would consume most of the 1e-2
# accuracy budget, so f32 is the better trade-off here.
MATMUL_DTYPE = jnp.float32


# ---------------------------------------------------------------------------
# In-kernel building blocks
# ---------------------------------------------------------------------------
def _conv3x3_rows(x2, bw_ref, *, H):
    """3x3 same-padded conv on a lane-dense (N*H, W*Cin) activation slab.

    The kw taps and the W-border zero padding are pre-folded into the banded
    weights bw_ref[kh] (shape (W*Cin, W*Cout)), so the conv is three MXU
    matmuls.  The kh taps are sublane rolls (XLU) with the H-border and
    cross-image rows masked to zero -- no im2col slab, no padded scratch,
    no (8,128)-crossing relayouts.
    """
    NH = x2.shape[0]
    f32 = jnp.float32
    row = jax.lax.broadcasted_iota(jnp.int32, x2.shape, 0) % H          # h index

    acc = jnp.dot(x2, bw_ref[1], preferred_element_type=f32)            # kh = 1
    x_up = jnp.where(row != 0, pltpu.roll(x2, 1, 0), 0.0)               # x[r-1]
    acc += jnp.dot(x_up, bw_ref[0], preferred_element_type=f32)         # kh = 0
    x_dn = jnp.where(row != H - 1, pltpu.roll(x2, NH - 1, 0), 0.0)      # x[r+1]
    acc += jnp.dot(x_dn, bw_ref[2], preferred_element_type=f32)         # kh = 2
    return acc


def _bn_affine(acc, pool, g, b, *, eps):
    """Training-mode BatchNorm (+affine) on a lane-dense (N*H, W*C) f32 acc.

    Channel c lives in lanes {w*C + c}.  One cross-sublane reduce produces the
    per-lane sum and sum-of-squares simultaneously; a single small matmul
    against the pooling matrix (which already carries the 1/(N*H*W) factor)
    pools the W lane-groups per channel and broadcasts the stats straight back
    to the lane layout, so mean/var/normalise stay 128-lane dense throughout.
    """
    WC = acc.shape[-1]
    cat = jnp.concatenate([acc, acc * acc], axis=-1)                    # (NH, 2*WC)
    s = jnp.sum(cat, axis=0, keepdims=True)                             # (1, 2*WC)
    mean = jnp.dot(s[:, :WC], pool, preferred_element_type=jnp.float32)
    ex2 = jnp.dot(s[:, WC:], pool, preferred_element_type=jnp.float32)
    var = jnp.maximum(ex2 - mean * mean, 0.0)        # clamp: f32 cancellation guard
    return (acc - mean) * (g * jax.lax.rsqrt(var + eps)) + b


def residual_block_kernel(x_ref, bw1_ref, bw2_ref, pool_ref,
                          g1_ref, b1_ref, g2_ref, b2_ref, o_ref, *, H, eps):
    """Whole residual block in one invocation; all operands lane-dense in VMEM."""
    pool = pool_ref[...]

    # stage 1: relu(bn1(conv1(x)))      (conv bias cancels under batch-stat BN)
    x = x_ref[...].astype(bw1_ref.dtype)
    h = _conv3x3_rows(x, bw1_ref, H=H)
    h = jnp.maximum(_bn_affine(h, pool, g1_ref[...], b1_ref[...], eps=eps), 0.0)

    # stage 2: relu(2 * bn2(conv2(h)))  ("x += x" pre-folded into g2/b2)
    y = _conv3x3_rows(h.astype(bw2_ref.dtype), bw2_ref, H=H)
    y = _bn_affine(y, pool, g2_ref[...], b2_ref[...], eps=eps)
    o_ref[...] = jnp.maximum(y, 0.0).astype(o_ref.dtype)


# ---------------------------------------------------------------------------
# Host-side weight / layout preparation
# ---------------------------------------------------------------------------
def _banded_conv_weight(w_hwio, W, dtype):
    """HWIO (3,3,Ci,Co) -> (3, W*Ci, W*Co) banded matrices (one per kh).

    bw[kh, wp*Ci+ci, w*Co+co] = w[kh, wp-w+1, ci, co] for |wp-w| <= 1, else 0;
    i.e. the kw taps and the W-border zero padding are folded into the weight
    so the kernel needs no column shifts at all.
    """
    KH, KW, Ci, Co = w_hwio.shape
    sel = np.zeros((KW, W, W), np.float32)
    for kw in range(KW):
        for w in range(W):
            wp = w + kw - 1
            if 0 <= wp < W:
                sel[kw, wp, w] = 1.0
    bw = jnp.einsum("xpw,kxio->kpiwo", jnp.asarray(sel), w_hwio)
    return bw.reshape(KH, W * Ci, W * Co).astype(dtype)


def _channel_pool_matrix(W, C, count):
    """(W*C, W*C): sums lanes of equal channel, re-broadcasts, folds in 1/count."""
    lane = np.arange(W * C)
    p = (lane[:, None] % C == lane[None, :] % C).astype(np.float32) / float(count)
    return jnp.asarray(p)


def residual_block_2d(x_nchw, params, eps=1e-5):
    """Pallas forward.  x_nchw: (N, Cin, H, W) f32 -> (N, Cout, H, W) f32.

    Default ResidualBlock2D config (use_1x1conv=False, strides=1, conv3=None).
    BatchNorm is evaluated in training mode (batch statistics, biased variance),
    matching a freshly constructed nn.Module called directly.
    """
    N, Cin, H, W = x_nchw.shape
    Cout = params["w1"].shape[-1]
    NH, WCo = N * H, W * Cout
    # Lane-density note: W*Cout = 128 at the test shape -> unmasked stores.
    # For shapes where W*C is not a 128-multiple the kernel stays correct but
    # stores become masked (perf only).

    # NCHW -> NHWC -> lane-dense (N*H, W*Cin) slab (layout plumbing in XLA).
    x2 = jnp.transpose(x_nchw, (0, 2, 3, 1)).reshape(NH, W * Cin)

    bw1 = _banded_conv_weight(params["w1"], W, MATMUL_DTYPE)
    bw2 = _banded_conv_weight(params["w2"], W, MATMUL_DTYPE)
    pool = _channel_pool_matrix(W, Cout, N * H * W)

    # BN affines broadcast to the lane layout; conv biases dropped (cancel
    # under batch-stat BN); the reference's `x += x` folded into BN2's affine.
    g1 = jnp.tile(params["g1"], W).reshape(1, WCo)
    b1 = jnp.tile(params["beta1"], W).reshape(1, WCo)
    g2 = jnp.tile(2.0 * params["g2"], W).reshape(1, WCo)
    b2 = jnp.tile(2.0 * params["beta2"], W).reshape(1, WCo)

    kernel = functools.partial(residual_block_kernel, H=H, eps=eps)
    vmem = pl.BlockSpec(memory_space=pltpu.MemorySpace.VMEM)

    out2 = pl.pallas_call(
        kernel,
        out_shape=jax.ShapeDtypeStruct((NH, WCo), jnp.float32),
        in_specs=[vmem] * 8,
        out_specs=vmem,
    )(x2, bw1, bw2, pool, g1, b1, g2, b2)

    out_nhwc = out2.reshape(N, H, W, Cout)
    return jnp.transpose(out_nhwc, (0, 3, 1, 2))                # NHWC -> NCHW


# ---------------------------------------------------------------------------
# Pure-JAX reference (mirrors the PyTorch module, training-mode BN) + test
# ---------------------------------------------------------------------------
def reference_forward(x_nchw, params, eps=1e-5):
    def conv(x, w_hwio, b):
        w_oihw = jnp.transpose(w_hwio, (3, 2, 0, 1))
        y = jax.lax.conv_general_dilated(
            x, w_oihw, window_strides=(1, 1), padding=((1, 1), (1, 1)),
            dimension_numbers=("NCHW", "OIHW", "NCHW"))
        return y + b[None, :, None, None]

    def bn(y, g, bt):
        mean = jnp.mean(y, axis=(0, 2, 3), keepdims=True)
        var = jnp.mean((y - mean) ** 2, axis=(0, 2, 3), keepdims=True)
        return (y - mean) / jnp.sqrt(var + eps) * g[None, :, None, None] \
               + bt[None, :, None, None]

    h = jax.nn.relu(bn(conv(x_nchw, params["w1"], params["b1"]),
                       params["g1"], params["beta1"]))
    h = bn(conv(h, params["w2"], params["b2"]), params["g2"], params["beta2"])
    h = h + h
    return jax.nn.relu(h)


def init_params(key, in_channels, out_channels):
    k1, k2, k3, k4 = jax.random.split(key, 4)
    return {
        "w1": 0.1 * jax.random.normal(k1, (3, 3, in_channels, out_channels), jnp.float32),
        "b1": 0.1 * jax.random.normal(k2, (out_channels,), jnp.float32),
        "w2": 0.1 * jax.random.normal(k3, (3, 3, out_channels, out_channels), jnp.float32),
        "b2": 0.1 * jax.random.normal(k4, (out_channels,), jnp.float32),
        "g1": jnp.ones((out_channels,), jnp.float32),
        "beta1": jnp.zeros((out_channels,), jnp.float32),
        "g2": jnp.ones((out_channels,), jnp.float32),
        "beta2": jnp.zeros((out_channels,), jnp.float32),
    }


if __name__ == "__main__":
    key = jax.random.PRNGKey(0)
    k_x, k_p = jax.random.split(key)

    N, Cin, Cout, H, W = 2, 4, 8, 16, 16
    x = jax.random.normal(k_x, (N, Cin, H, W), jnp.float32)     # NCHW, like PyTorch
    params = init_params(k_p, Cin, Cout)

    out = jax.block_until_ready(residual_block_2d(x, params))
    ref = jax.block_until_ready(reference_forward(x, params))

    assert out.shape == (N, Cout, H, W)
    assert bool(jnp.all(jnp.isfinite(out)))
    assert bool(jnp.allclose(out, ref, atol=1e-2, rtol=1e-2)), \
        f"max abs err = {float(jnp.max(jnp.abs(out - ref)))}"

    print("KERNEL_OK")
</pallas_src>

<mosaic_0001>
module attributes {stable_mosaic.version = 11 : i64} {
  func.func @residual_block_kernel(%arg0: memref<32x64xf32, #tpu.memory_space<vmem>>, %arg1: memref<3x64x128xf32, #tpu.memory_space<vmem>>, %arg2: memref<3x128x128xf32, #tpu.memory_space<vmem>>, %arg3: memref<128x128xf32, #tpu.memory_space<vmem>>, %arg4: memref<1x128xf32, #tpu.memory_space<vmem>>, %arg5: memref<1x128xf32, #tpu.memory_space<vmem>>, %arg6: memref<1x128xf32, #tpu.memory_space<vmem>>, %arg7: memref<1x128xf32, #tpu.memory_space<vmem>>, %arg8: memref<32x128xf32, #tpu.memory_space<vmem>>) attributes {dimension_semantics = [], scalar_prefetch = 0 : i64, scratch_operands = 0 : i64, tpu.core_type = #tpu.core_type<tc>} {
    %c0 = arith.constant 0 : index
    %c0_0 = arith.constant 0 : index
    %0 = vector.load %arg3[%c0, %c0_0] : memref<128x128xf32, #tpu.memory_space<vmem>>, vector<128x128xf32>
    %c0_1 = arith.constant 0 : index
    %c0_2 = arith.constant 0 : index
    %1 = vector.load %arg0[%c0_1, %c0_2] : memref<32x64xf32, #tpu.memory_space<vmem>>, vector<32x64xf32>
    %2 = tpu.iota {dimensions = array<i32: 0>} : vector<32x64xi32>
    %c16_i32 = arith.constant 16 : i32
    %c0_i32 = arith.constant 0 : i32
    %3 = arith.cmpi eq, %c16_i32, %c0_i32 : i32
    %c1_i32 = arith.constant 1 : i32
    %4 = arith.select %3, %c1_i32, %c16_i32 : i32
    %5 = vector.broadcast %4 : i32 to vector<32x64xi32>
    %6 = arith.remsi %2, %5 : vector<32x64xi32>
    %c0_i32_3 = arith.constant 0 : i32
    %7 = vector.broadcast %c0_i32_3 : i32 to vector<32x64xi32>
    %8 = arith.cmpi ne, %6, %7 : vector<32x64xi32>
    %c0_i32_4 = arith.constant 0 : i32
    %9 = vector.broadcast %c0_i32_4 : i32 to vector<32x64xi32>
    %10 = arith.cmpi slt, %6, %9 : vector<32x64xi32>
    %c0_i32_5 = arith.constant 0 : i32
    %11 = arith.cmpi slt, %4, %c0_i32_5 : i32
    %12 = vector.broadcast %11 : i1 to vector<32x64xi1>
    %13 = vector.broadcast %12 : vector<32x64xi1> to vector<32x64xi1>
    %14 = arith.xori %10, %13 : vector<32x64xi1>
    %15 = arith.andi %14, %8 : vector<32x64xi1>
    %16 = vector.broadcast %4 : i32 to vector<32x64xi32>
    %17 = arith.addi %6, %16 : vector<32x64xi32>
    %18 = arith.select %15, %17, %6 : vector<32x64xi1>, vector<32x64xi32>
    %c1 = arith.constant 1 : index
    %c0_6 = arith.constant 0 : index
    %c0_7 = arith.constant 0 : index
    %19 = vector.load %arg1[%c1, %c0_6, %c0_7] : memref<3x64x128xf32, #tpu.memory_space<vmem>>, vector<1x64x128xf32>
    %20 = vector.shape_cast %19 : vector<1x64x128xf32> to vector<64x128xf32>
    %cst = arith.constant dense<0.000000e+00> : vector<32x128xf32>
    %21 = tpu.matmul %1, %20, %cst {dimension_numbers = #tpu.dot_dimension_numbers<[1], [0], [0], [1], [0, 0, 1, 1], [], []>} : vector<32x64xf32>, vector<64x128xf32>, vector<32x128xf32> -> vector<32x128xf32>
    %c0_i32_8 = arith.constant 0 : i32
    %22 = vector.broadcast %c0_i32_8 : i32 to vector<32x64xi32>
    %23 = arith.cmpi ne, %18, %22 : vector<32x64xi32>
    %c1_i32_9 = arith.constant 1 : i32
    %24 = tpu.dynamic_rotate %1 by %c1_i32_9 dim 0 : vector<32x64xf32>, i32 -> vector<32x64xf32>
    %cst_10 = arith.constant 0.000000e+00 : f32
    %25 = vector.broadcast %cst_10 : f32 to vector<32x64xf32>
    %26 = arith.select %23, %24, %25 : vector<32x64xi1>, vector<32x64xf32>
    %c0_11 = arith.constant 0 : index
    %c0_12 = arith.constant 0 : index
    %c0_13 = arith.constant 0 : index
    %27 = vector.load %arg1[%c0_11, %c0_12, %c0_13] : memref<3x64x128xf32, #tpu.memory_space<vmem>>, vector<1x64x128xf32>
    %28 = vector.shape_cast %27 : vector<1x64x128xf32> to vector<64x128xf32>
    %cst_14 = arith.constant dense<0.000000e+00> : vector<32x128xf32>
    %29 = tpu.matmul %26, %28, %cst_14 {dimension_numbers = #tpu.dot_dimension_numbers<[1], [0], [0], [1], [0, 0, 1, 1], [], []>} : vector<32x64xf32>, vector<64x128xf32>, vector<32x128xf32> -> vector<32x128xf32>
    %30 = arith.addf %21, %29 : vector<32x128xf32>
    %c15_i32 = arith.constant 15 : i32
    %31 = vector.broadcast %c15_i32 : i32 to vector<32x64xi32>
    %32 = arith.cmpi ne, %18, %31 : vector<32x64xi32>
    %c31_i32 = arith.constant 31 : i32
    %33 = tpu.dynamic_rotate %1 by %c31_i32 dim 0 : vector<32x64xf32>, i32 -> vector<32x64xf32>
    %cst_15 = arith.constant 0.000000e+00 : f32
    %34 = vector.broadcast %cst_15 : f32 to vector<32x64xf32>
    %35 = arith.select %32, %33, %34 : vector<32x64xi1>, vector<32x64xf32>
    %c2 = arith.constant 2 : index
    %c0_16 = arith.constant 0 : index
    %c0_17 = arith.constant 0 : index
    %36 = vector.load %arg1[%c2, %c0_16, %c0_17] : memref<3x64x128xf32, #tpu.memory_space<vmem>>, vector<1x64x128xf32>
    %37 = vector.shape_cast %36 : vector<1x64x128xf32> to vector<64x128xf32>
    %cst_18 = arith.constant dense<0.000000e+00> : vector<32x128xf32>
    %38 = tpu.matmul %35, %37, %cst_18 {dimension_numbers = #tpu.dot_dimension_numbers<[1], [0], [0], [1], [0, 0, 1, 1], [], []>} : vector<32x64xf32>, vector<64x128xf32>, vector<32x128xf32> -> vector<32x128xf32>
    %39 = arith.addf %30, %38 : vector<32x128xf32>
    %c0_19 = arith.constant 0 : index
    %c0_20 = arith.constant 0 : index
    %40 = vector.load %arg4[%c0_19, %c0_20] : memref<1x128xf32, #tpu.memory_space<vmem>>, vector<1x128xf32>
    %c0_21 = arith.constant 0 : index
    %c0_22 = arith.constant 0 : index
    %41 = vector.load %arg5[%c0_21, %c0_22] : memref<1x128xf32, #tpu.memory_space<vmem>>, vector<1x128xf32>
    %42 = arith.mulf %39, %39 : vector<32x128xf32>
    %43 = tpu.concatenate %39, %42 in 1 : vector<32x128xf32>, vector<32x128xf32> -> vector<32x256xf32>
    %cst_23 = arith.constant dense<0.000000e+00> : vector<256xf32>
    %44 = vector.multi_reduction <add>, %43, %cst_23 [0] : vector<32x256xf32> to vector<256xf32>
    %45 = vector.shape_cast %44 : vector<256xf32> to vector<1x256xf32>
    %46 = vector.extract_strided_slice %45 {offsets = [0, 0], sizes = [1, 128], strides = [1, 1]} : vector<1x256xf32> to vector<1x128xf32>
    %cst_24 = arith.constant dense<0.000000e+00> : vector<1x128xf32>
    %47 = tpu.matmul %46, %0, %cst_24 {dimension_numbers = #tpu.dot_dimension_numbers<[1], [0], [0], [1], [0, 0, 1, 1], [], []>} : vector<1x128xf32>, vector<128x128xf32>, vector<1x128xf32> -> vector<1x128xf32>
    %48 = vector.extract_strided_slice %45 {offsets = [0, 128], sizes = [1, 128], strides = [1, 1]} : vector<1x256xf32> to vector<1x128xf32>
    %cst_25 = arith.constant dense<0.000000e+00> : vector<1x128xf32>
    %49 = tpu.matmul %48, %0, %cst_25 {dimension_numbers = #tpu.dot_dimension_numbers<[1], [0], [0], [1], [0, 0, 1, 1], [], []>} : vector<1x128xf32>, vector<128x128xf32>, vector<1x128xf32> -> vector<1x128xf32>
    %50 = arith.mulf %47, %47 : vector<1x128xf32>
    %51 = arith.subf %49, %50 : vector<1x128xf32>
    %cst_26 = arith.constant 0.000000e+00 : f32
    %52 = vector.broadcast %cst_26 : f32 to vector<1x128xf32>
    %53 = arith.maximumf %51, %52 : vector<1x128xf32>
    %54 = vector.broadcast %47 : vector<1x128xf32> to vector<32x128xf32>
    %55 = arith.subf %39, %54 : vector<32x128xf32>
    %cst_27 = arith.constant 9.99999974E-6 : f32
    %56 = vector.broadcast %cst_27 : f32 to vector<1x128xf32>
    %57 = arith.addf %53, %56 : vector<1x128xf32>
    %58 = math.rsqrt %57 : vector<1x128xf32>
    %59 = arith.mulf %40, %58 : vector<1x128xf32>
    %60 = vector.broadcast %59 : vector<1x128xf32> to vector<32x128xf32>
    %61 = arith.mulf %55, %60 : vector<32x128xf32>
    %62 = vector.broadcast %41 : vector<1x128xf32> to vector<32x128xf32>
    %63 = arith.addf %61, %62 : vector<32x128xf32>
    %cst_28 = arith.constant 0.000000e+00 : f32
    %64 = vector.broadcast %cst_28 : f32 to vector<32x128xf32>
    %65 = arith.maximumf %63, %64 : vector<32x128xf32>
    %66 = tpu.iota {dimensions = array<i32: 0>} : vector<32x128xi32>
    %c16_i32_29 = arith.constant 16 : i32
    %c0_i32_30 = arith.constant 0 : i32
    %67 = arith.cmpi eq, %c16_i32_29, %c0_i32_30 : i32
    %c1_i32_31 = arith.constant 1 : i32
    %68 = arith.select %67, %c1_i32_31, %c16_i32_29 : i32
    %69 = vector.broadcast %68 : i32 to vector<32x128xi32>
    %70 = arith.remsi %66, %69 : vector<32x128xi32>
    %c0_i32_32 = arith.constant 0 : i32
    %71 = vector.broadcast %c0_i32_32 : i32 to vector<32x128xi32>
    %72 = arith.cmpi ne, %70, %71 : vector<32x128xi32>
    %c0_i32_33 = arith.constant 0 : i32
    %73 = vector.broadcast %c0_i32_33 : i32 to vector<32x128xi32>
    %74 = arith.cmpi slt, %70, %73 : vector<32x128xi32>
    %c0_i32_34 = arith.constant 0 : i32
    %75 = arith.cmpi slt, %68, %c0_i32_34 : i32
    %76 = vector.broadcast %75 : i1 to vector<32x128xi1>
    %77 = vector.broadcast %76 : vector<32x128xi1> to vector<32x128xi1>
    %78 = arith.xori %74, %77 : vector<32x128xi1>
    %79 = arith.andi %78, %72 : vector<32x128xi1>
    %80 = vector.broadcast %68 : i32 to vector<32x128xi32>
    %81 = arith.addi %70, %80 : vector<32x128xi32>
    %82 = arith.select %79, %81, %70 : vector<32x128xi1>, vector<32x128xi32>
    %c1_35 = arith.constant 1 : index
    %c0_36 = arith.constant 0 : index
    %c0_37 = arith.constant 0 : index
    %83 = vector.load %arg2[%c1_35, %c0_36, %c0_37] : memref<3x128x128xf32, #tpu.memory_space<vmem>>, vector<1x128x128xf32>
    %84 = vector.shape_cast %83 : vector<1x128x128xf32> to vector<128x128xf32>
    %cst_38 = arith.constant dense<0.000000e+00> : vector<32x128xf32>
    %85 = tpu.matmul %65, %84, %cst_38 {dimension_numbers = #tpu.dot_dimension_numbers<[1], [0], [0], [1], [0, 0, 1, 1], [], []>} : vector<32x128xf32>, vector<128x128xf32>, vector<32x128xf32> -> vector<32x128xf32>
    %c0_i32_39 = arith.constant 0 : i32
    %86 = vector.broadcast %c0_i32_39 : i32 to vector<32x128xi32>
    %87 = arith.cmpi ne, %82, %86 : vector<32x128xi32>
    %c1_i32_40 = arith.constant 1 : i32
    %88 = tpu.dynamic_rotate %65 by %c1_i32_40 dim 0 : vector<32x128xf32>, i32 -> vector<32x128xf32>
    %cst_41 = arith.constant 0.000000e+00 : f32
    %89 = vector.broadcast %cst_41 : f32 to vector<32x128xf32>
    %90 = arith.select %87, %88, %89 : vector<32x128xi1>, vector<32x128xf32>
    %c0_42 = arith.constant 0 : index
    %c0_43 = arith.constant 0 : index
    %c0_44 = arith.constant 0 : index
    %91 = vector.load %arg2[%c0_42, %c0_43, %c0_44] : memref<3x128x128xf32, #tpu.memory_space<vmem>>, vector<1x128x128xf32>
    %92 = vector.shape_cast %91 : vector<1x128x128xf32> to vector<128x128xf32>
    %cst_45 = arith.constant dense<0.000000e+00> : vector<32x128xf32>
    %93 = tpu.matmul %90, %92, %cst_45 {dimension_numbers = #tpu.dot_dimension_numbers<[1], [0], [0], [1], [0, 0, 1, 1], [], []>} : vector<32x128xf32>, vector<128x128xf32>, vector<32x128xf32> -> vector<32x128xf32>
    %94 = arith.addf %85, %93 : vector<32x128xf32>
    %c15_i32_46 = arith.constant 15 : i32
    %95 = vector.broadcast %c15_i32_46 : i32 to vector<32x128xi32>
    %96 = arith.cmpi ne, %82, %95 : vector<32x128xi32>
    %c31_i32_47 = arith.constant 31 : i32
    %97 = tpu.dynamic_rotate %65 by %c31_i32_47 dim 0 : vector<32x128xf32>, i32 -> vector<32x128xf32>
    %cst_48 = arith.constant 0.000000e+00 : f32
    %98 = vector.broadcast %cst_48 : f32 to vector<32x128xf32>
    %99 = arith.select %96, %97, %98 : vector<32x128xi1>, vector<32x128xf32>
    %c2_49 = arith.constant 2 : index
    %c0_50 = arith.constant 0 : index
    %c0_51 = arith.constant 0 : index
    %100 = vector.load %arg2[%c2_49, %c0_50, %c0_51] : memref<3x128x128xf32, #tpu.memory_space<vmem>>, vector<1x128x128xf32>
    %101 = vector.shape_cast %100 : vector<1x128x128xf32> to vector<128x128xf32>
    %cst_52 = arith.constant dense<0.000000e+00> : vector<32x128xf32>
    %102 = tpu.matmul %99, %101, %cst_52 {dimension_numbers = #tpu.dot_dimension_numbers<[1], [0], [0], [1], [0, 0, 1, 1], [], []>} : vector<32x128xf32>, vector<128x128xf32>, vector<32x128xf32> -> vector<32x128xf32>
    %103 = arith.addf %94, %102 : vector<32x128xf32>
    %c0_53 = arith.constant 0 : index
    %c0_54 = arith.constant 0 : index
    %104 = vector.load %arg6[%c0_53, %c0_54] : memref<1x128xf32, #tpu.memory_space<vmem>>, vector<1x128xf32>
    %c0_55 = arith.constant 0 : index
    %c0_56 = arith.constant 0 : index
    %105 = vector.load %arg7[%c0_55, %c0_56] : memref<1x128xf32, #tpu.memory_space<vmem>>, vector<1x128xf32>
    %106 = arith.mulf %103, %103 : vector<32x128xf32>
    %107 = tpu.concatenate %103, %106 in 1 : vector<32x128xf32>, vector<32x128xf32> -> vector<32x256xf32>
    %cst_57 = arith.constant dense<0.000000e+00> : vector<256xf32>
    %108 = vector.multi_reduction <add>, %107, %cst_57 [0] : vector<32x256xf32> to vector<256xf32>
    %109 = vector.shape_cast %108 : vector<256xf32> to vector<1x256xf32>
    %110 = vector.extract_strided_slice %109 {offsets = [0, 0], sizes = [1, 128], strides = [1, 1]} : vector<1x256xf32> to vector<1x128xf32>
    %cst_58 = arith.constant dense<0.000000e+00> : vector<1x128xf32>
    %111 = tpu.matmul %110, %0, %cst_58 {dimension_numbers = #tpu.dot_dimension_numbers<[1], [0], [0], [1], [0, 0, 1, 1], [], []>} : vector<1x128xf32>, vector<128x128xf32>, vector<1x128xf32> -> vector<1x128xf32>
    %112 = vector.extract_strided_slice %109 {offsets = [0, 128], sizes = [1, 128], strides = [1, 1]} : vector<1x256xf32> to vector<1x128xf32>
    %cst_59 = arith.constant dense<0.000000e+00> : vector<1x128xf32>
    %113 = tpu.matmul %112, %0, %cst_59 {dimension_numbers = #tpu.dot_dimension_numbers<[1], [0], [0], [1], [0, 0, 1, 1], [], []>} : vector<1x128xf32>, vector<128x128xf32>, vector<1x128xf32> -> vector<1x128xf32>
    %114 = arith.mulf %111, %111 : vector<1x128xf32>
    %115 = arith.subf %113, %114 : vector<1x128xf32>
    %cst_60 = arith.constant 0.000000e+00 : f32
    %116 = vector.broadcast %cst_60 : f32 to vector<1x128xf32>
    %117 = arith.maximumf %115, %116 : vector<1x128xf32>
    %118 = vector.broadcast %111 : vector<1x128xf32> to vector<32x128xf32>
    %119 = arith.subf %103, %118 : vector<32x128xf32>
    %cst_61 = arith.constant 9.99999974E-6 : f32
    %120 = vector.broadcast %cst_61 : f32 to vector<1x128xf32>
    %121 = arith.addf %117, %120 : vector<1x128xf32>
    %122 = math.rsqrt %121 : vector<1x128xf32>
    %123 = arith.mulf %104, %122 : vector<1x128xf32>
    %124 = vector.broadcast %123 : vector<1x128xf32> to vector<32x128xf32>
    %125 = arith.mulf %119, %124 : vector<32x128xf32>
    %126 = vector.broadcast %105 : vector<1x128xf32> to vector<32x128xf32>
    %127 = arith.addf %125, %126 : vector<32x128xf32>
    %cst_62 = arith.constant 0.000000e+00 : f32
    %128 = vector.broadcast %cst_62 : f32 to vector<32x128xf32>
    %129 = arith.maximumf %127, %128 : vector<32x128xf32>
    %c0_63 = arith.constant 0 : index
    %c0_64 = arith.constant 0 : index
    %130 = vector.load %arg8[%c0_63, %c0_64] : memref<32x128xf32, #tpu.memory_space<vmem>>, vector<32x128xf32>
    tpu.vector_store %arg8[%c0_63, %c0_64], %129 {strides = array<i32>} : memref<32x128xf32, #tpu.memory_space<vmem>>, vector<32x128xf32>,
    return
  }
}

</mosaic_0001>

<llo_original>
// kernel: tpu_custom_call.1
$region0: #{tpu_custom_call.1}
  #allocation0 [shape = 'u32[]', space=smem, size = 0x4, offset = 0x4, fixed_abs, tag = 'smem constant byte address 0x4 - core index']
  #allocation1 [shape = 'u32[144,128]{1,0:T(1,128)}', space=vmem, size = 0x12000, scoped, tag = 'internal scratch']
  %s0 = inlined_call_operand.hbm [shape: f32[32,64], index: 0, kind: input, shape index: {}]
  %s1 = inlined_call_operand.hbm [shape: f32[3,64,128], index: 1, kind: input, shape index: {}]
  %s2 = inlined_call_operand.hbm [shape: f32[3,128,128], index: 2, kind: input, shape index: {}]
  %s3 = inlined_call_operand.hbm [shape: f32[128,128], index: 3, kind: input, shape index: {}]
  %s4 = inlined_call_operand.vmem [shape: f32[1,128], index: 4, kind: input, shape index: {}]
  %s5 = inlined_call_operand.vmem [shape: f32[1,128], index: 5, kind: input, shape index: {}]
  %s6 = inlined_call_operand.vmem [shape: f32[1,128], index: 6, kind: input, shape index: {}]
  %s7 = inlined_call_operand.vmem [shape: f32[1,128], index: 7, kind: input, shape index: {}]
  %s8 = inlined_call_operand.hbm [shape: f32[32,128], index: 8, kind: output, shape index: {}]
  %s9 = sld [smem:[#allocation0]]
  $region58: #{tpu_custom_call.1} parent=0
    _
  %s11 = ssub.s32 1, %s9
  %s12 = scalar_select 0, %s11, %s9
  $region1: #{tpu_custom_call.1} parent=0
    #allocation2 [shape = 'u8[16384]{0}', space=vmem, size = 0x4000, scoped, tag = 'input window, operand 0, single buffered']
    #allocation3 [shape = 's32[1]{0}', space=sflag, size = 0x4, scoped, tag = 'scoped memory for tpu_custom_call.1']
    #allocation4 [shape = 's32[1]{0}', space=sflag, size = 0x4, scoped, tag = 'scoped memory for tpu_custom_call.1']
    #allocation5 [shape = 'u8[98304]{0}', space=vmem, size = 0x18000, scoped, tag = 'input window, operand 1, single buffered']
    #allocation6 [shape = 's32[1]{0}', space=sflag, size = 0x4, scoped, tag = 'scoped memory for tpu_custom_call.1']
    #allocation7 [shape = 'u8[196608]{0}', space=vmem, size = 0x30000, scoped, tag = 'input window, operand 2, single buffered']
    #allocation8 [shape = 'u8[65536]{0}', space=vmem, size = 0x10000, scoped, tag = 'input window, operand 3, single buffered']
    #allocation9 [shape = 's32[1]{0}', space=sflag, size = 0x4, scoped, tag = 'scoped memory for tpu_custom_call.1']
    #allocation10 [shape = 'u8[16384]{0}', space=vmem, size = 0x4000, scoped, tag = 'output window, operand 0, single buffered']
    %13 = vsyncpa [#allocation3], 0
    %14 = vsyncpa [#allocation6], 0
    %15 = vsyncpa [#allocation9], 0
    %16 = vsyncpa [#allocation4], 0
    // Predicated region
    $region2: #{tpu_custom_call.1} parent=1 // pred_check
      _
    $region3: #{tpu_custom_call.1} parent=1 // pred_check_branch
      %18 = sbr.rel (0) target = $region5
    $region4: #{tpu_custom_call.1} parent=1 // pred_region
      %s20 = ssub.s32 512, 512
      %21 = vsyncadd [#allocation3], %s20
      %s22 = sshll.u32 [#allocation2], 4
      %s23 = int_to_ptr.vmem [resolvable:$true] %s22
      %28 = dma.hbm_to_vmem [thread:$0]  %s0, 512, %s23, [#allocation3], 128, 128, 8
    $region5: #{tpu_custom_call.1} parent=1 // pred_fallthru
      _
    // Predicated region
    $region6: #{tpu_custom_call.1} parent=1 // pred_check
      _
    $region7: #{tpu_custom_call.1} parent=1 // pred_check_branch
      %30 = sbr.rel (0) target = $region9
    $region8: #{tpu_custom_call.1} parent=1 // pred_region
      %s32 = ssub.s32 3072, 3072
      %33 = vsyncadd [#allocation6], %s32
      %s34 = sshll.u32 [#allocation5], 4
      %s35 = int_to_ptr.vmem [resolvable:$true] %s34
      %40 = dma.hbm_to_vmem [thread:$0]  %s1, 3072, %s35, [#allocation6], 128, 128, 8
    $region9: #{tpu_custom_call.1} parent=1 // pred_fallthru
      _
    // Predicated region
    $region10: #{tpu_custom_call.1} parent=1 // pred_check
      _
    $region11: #{tpu_custom_call.1} parent=1 // pred_check_branch
      %42 = sbr.rel (0) target = $region13
    $region12: #{tpu_custom_call.1} parent=1 // pred_region
      %s44 = ssub.s32 6144, 6144
      %45 = vsyncadd [#allocation6], %s44
      %s46 = sshll.u32 [#allocation7], 4
      %s47 = int_to_ptr.vmem [resolvable:$true] %s46
      %52 = dma.hbm_to_vmem [thread:$0]  %s2, 6144, %s47, [#allocation6], 128, 128, 8
    $region13: #{tpu_custom_call.1} parent=1 // pred_fallthru
      _
    // Predicated region
    $region14: #{tpu_custom_call.1} parent=1 // pred_check
      _
    $region15: #{tpu_custom_call.1} parent=1 // pred_check_branch
      %54 = sbr.rel (0) target = $region17
    $region16: #{tpu_custom_call.1} parent=1 // pred_region
      %s56 = ssub.s32 2048, 2048
      %57 = vsyncadd [#allocation9], %s56
      %s58 = sshll.u32 [#allocation8], 4
      %s59 = int_to_ptr.vmem [resolvable:$true] %s58
      %64 = dma.hbm_to_vmem [thread:$0]  %s3, 2048, %s59, [#allocation9], 128, 128, 8
    $region17: #{tpu_custom_call.1} parent=1 // pred_fallthru
      _
    // Predicated region
    $region18: #{tpu_custom_call.1} parent=1 // pred_check
      _
    $region19: #{tpu_custom_call.1} parent=1 // pred_check_branch
      %66 = sbr.rel (0) target = $region21
    $region20: #{tpu_custom_call.1} parent=1 // pred_region
      _
    $region21: #{tpu_custom_call.1} parent=1 // pred_fallthru
      _
    // Predicated region
    $region22: #{tpu_custom_call.1} parent=1 // pred_check
      _
    $region23: #{tpu_custom_call.1} parent=1 // pred_check_branch
      %68 = sbr.rel (0) target = $region25
    $region24: #{tpu_custom_call.1} parent=1 // pred_region
      _
    $region25: #{tpu_custom_call.1} parent=1 // pred_fallthru
      _
    // Predicated region
    $region26: #{tpu_custom_call.1} parent=1 // pred_check
      _
    $region27: #{tpu_custom_call.1} parent=1 // pred_check_branch
      %70 = sbr.rel (0) target = $region29
    $region28: #{tpu_custom_call.1} parent=1 // pred_region
      _
    $region29: #{tpu_custom_call.1} parent=1 // pred_fallthru
      _
    // Predicated region
    $region30: #{tpu_custom_call.1} parent=1 // pred_check
      _
    $region31: #{tpu_custom_call.1} parent=1 // pred_check_branch
      %72 = sbr.rel (0) target = $region33
    $region32: #{tpu_custom_call.1} parent=1 // pred_region
      _
    $region33: #{tpu_custom_call.1} parent=1 // pred_fallthru
      _
    // Predicated region
    $region34: #{tpu_custom_call.1} parent=1 // pred_check
      _
    $region35: #{tpu_custom_call.1} parent=1 // pred_check_branch
      %74 = sbr.rel (0) target = $region37
    $region36: #{tpu_custom_call.1} parent=1 // pred_region
      %75 = dma.done [#allocation3], 512
    $region37: #{tpu_custom_call.1} parent=1 // pred_fallthru
      _
    // Predicated region
    $region38: #{tpu_custom_call.1} parent=1 // pred_check
      _
    $region39: #{tpu_custom_call.1} parent=1 // pred_check_branch
      %77 = sbr.rel (0) target = $region41
    $region40: #{tpu_custom_call.1} parent=1 // pred_region
      %78 = dma.done [#allocation6], 3072
    $region41: #{tpu_custom_call.1} parent=1 // pred_fallthru
      _
    // Predicated region
    $region42: #{tpu_custom_call.1} parent=1 // pred_check
      _
    $region43: #{tpu_custom_call.1} parent=1 // pred_check_branch
      %80 = sbr.rel (0) target = $region45
    $region44: #{tpu_custom_call.1} parent=1 // pred_region
      %81 = dma.done [#allocation6], 6144
    $region45: #{tpu_custom_call.1} parent=1 // pred_fallthru
      _
    // Predicated region
    $region46: #{tpu_custom_call.1} parent=1 // pred_check
      _
    $region47: #{tpu_custom_call.1} parent=1 // pred_check_branch
      %83 = sbr.rel (0) target = $region49
    $region48: #{tpu_custom_call.1} parent=1 // pred_region
      %84 = dma.done [#allocation9], 2048
    $region49: #{tpu_custom_call.1} parent=1 // pred_fallthru
      _
    %v85 = vld [vmem:[#allocation8] sm:$0xff]
    %v86 = vld [vmem:[#allocation8 + $0x8] sm:$0xff]
    %v87 = vld [vmem:[#allocation8 + $0x10] sm:$0xff]
    %v88 = vld [vmem:[#allocation8 + $0x18] sm:$0xff]
    %v89 = vld [vmem:[#allocation8 + $0x20] sm:$0xff]
    %v90 = vld [vmem:[#allocation8 + $0x28] sm:$0xff]
    %v91 = vld [vmem:[#allocation8 + $0x30] sm:$0xff]
    %v92 = vld [vmem:[#allocation8 + $0x38] sm:$0xff]
    %v93 = vld [vmem:[#allocation8 + $0x40] sm:$0xff]
    %v94 = vld [vmem:[#allocation8 + $0x48] sm:$0xff]
    %v95 = vld [vmem:[#allocation8 + $0x50] sm:$0xff]
    %v96 = vld [vmem:[#allocation8 + $0x58] sm:$0xff]
    %v97 = vld [vmem:[#allocation8 + $0x60] sm:$0xff]
    %v98 = vld [vmem:[#allocation8 + $0x68] sm:$0xff]
    %v99 = vld [vmem:[#allocation8 + $0x70] sm:$0xff]
    %v100 = vld [vmem:[#allocation8 + $0x78] sm:$0xff]
    %v101 = vld [vmem:[#allocation2] sm:$0xff]
    %v102 = vld [vmem:[#allocation2 + $0x8] sm:$0xff]
    %v103 = vld [vmem:[#allocation2 + $0x10] sm:$0xff]
    %v104 = vld [vmem:[#allocation2 + $0x18] sm:$0xff]
    %v105 = vlaneseq
    %v106 = vshrl.u32 %v105, 7
    %v107 = vadd.s32 %v106, 8
    %v108 = vadd.s32 %v106, 16
    %v109 = vadd.s32 %v106, 24
    %vm110 = vcmp.lt.s32.totalorder %v106, 0
    %v111 = vsub.s32 0, %v106
    %v112 = vsel %vm110, %v111, %v106
    %v113 = vshrl.u32 %v112, 4
    %v114 = vand.u32 %v112, 15
    %v115 = vsub.s32 0, %v114
    %v116 = vsel %vm110, %v115, %v114
    %vm117 = vcmp.lt.s32.totalorder %v107, 0
    %v118 = vsub.s32 0, %v107
    %v119 = vsel %vm117, %v118, %v107
    %v120 = vshrl.u32 %v119, 4
    %v121 = vand.u32 %v119, 15
    %v122 = vsub.s32 0, %v121
    %v123 = vsel %vm117, %v122, %v121
    %vm124 = vcmp.lt.s32.totalorder %v108, 0
    %v125 = vsub.s32 0, %v108
    %v126 = vsel %vm124, %v125, %v108
    %v127 = vshrl.u32 %v126, 4
    %v128 = vand.u32 %v126, 15
    %v129 = vsub.s32 0, %v128
    %v130 = vsel %vm124, %v129, %v128
    %vm131 = vcmp.lt.s32.totalorder %v109, 0
    %v132 = vsub.s32 0, %v109
    %v133 = vsel %vm131, %v132, %v109
    %v134 = vshrl.u32 %v133, 4
    %v135 = vand.u32 %v133, 15
    %v136 = vsub.s32 0, %v135
    %v137 = vsel %vm131, %v136, %v135
    %vm138 = vcmp.ne.s32.totalorder %v116, 0
    %vm139 = vcmp.ne.s32.totalorder %v123, 0
    %vm140 = vcmp.ne.s32.totalorder %v130, 0
    %vm141 = vcmp.ne.s32.totalorder %v137, 0
    %vm142 = vcmp.lt.s32.totalorder %v116, 0
    %vm143 = vcmp.lt.s32.totalorder %v123, 0
    %vm144 = vcmp.lt.s32.totalorder %v130, 0
    %vm145 = vcmp.lt.s32.totalorder %v137, 0
    %vm146 = vmand %vm142, %vm138
    %vm147 = vmand %vm143, %vm139
    %vm148 = vmand %vm144, %vm140
    %vm149 = vmand %vm145, %vm141
    %v150 = vadd.s32 %v116, 16
    %v151 = vadd.s32 %v123, 16
    %v152 = vadd.s32 %v130, 16
    %v153 = vadd.s32 %v137, 16
    %v154 = vsel %vm146, %v150, %v116
    %v155 = vsel %vm147, %v151, %v123
    %v156 = vsel %vm148, %v152, %v130
    %v157 = vsel %vm149, %v153, %v137
    %s158 = scalar_lea.vmem [#allocation5], 64
    %v159 = vld [vmem:[%s158] sm:$0xff]
    %v160 = vld [vmem:[%s158 + $0x8] sm:$0xff]
    %v161 = vld [vmem:[%s158 + $0x10] sm:$0xff]
    %v162 = vld [vmem:[%s158 + $0x18] sm:$0xff]
    %v163 = vld [vmem:[%s158 + $0x20] sm:$0xff]
    %v164 = vld [vmem:[%s158 + $0x28] sm:$0xff]
    %v165 = vld [vmem:[%s158 + $0x30] sm:$0xff]
    %v166 = vld [vmem:[%s158 + $0x38] sm:$0xff]
    %vm167 = vcmp.ne.s32.totalorder %v154, 0
    %vm168 = vcmp.ne.s32.totalorder %v155, 0
    %vm169 = vcmp.ne.s32.totalorder %v156, 0
    %vm170 = vcmp.ne.s32.totalorder %v157, 0
    %v171 = vrot.slane %v101, 7
    %v172 = vrot.slane %v102, 7
    %v173 = vrot.slane %v103, 7
    %v174 = vrot.slane %v104, 7
    %vm175 = vcmp.lt.s32.totalorder %v106, 1
    %v176 = vsel %vm175, %v173, %v174
    %v177 = vsel %vm175, %v172, %v173
    %v178 = vsel %vm175, %v171, %v172
    %v179 = vsel %vm175, %v174, %v171
    %v180 = vsel %vm167, %v179, 0.0
    %v181 = vsel %vm168, %v178, 0.0
    %v182 = vsel %vm169, %v177, 0.0
    %v183 = vsel %vm170, %v176, 0.0
    %v184 = vld [vmem:[#allocation5] sm:$0xff]
    %v185 = vld [vmem:[#allocation5 + $0x8] sm:$0xff]
    %v186 = vld [vmem:[#allocation5 + $0x10] sm:$0xff]
    %v187 = vld [vmem:[#allocation5 + $0x18] sm:$0xff]
    %v188 = vld [vmem:[#allocation5 + $0x20] sm:$0xff]
    %v189 = vld [vmem:[#allocation5 + $0x28] sm:$0xff]
    %v190 = vld [vmem:[#allocation5 + $0x30] sm:$0xff]
    %v191 = vld [vmem:[#allocation5 + $0x38] sm:$0xff]
    %vm192 = vcmask 523264
    %v194 = vsel %vm192, %v180, 0
    %v197 = vsel %vm192, %v181, 0
    %v200 = vsel %vm192, %v182, 0
    %v203 = vsel %vm192, %v183, 0
    %205 = vmatprep.subr.mxu0 0.0
    %206 = vmatpush1.msra.mxu0 %v184
    %207 = vmatprep.subr.mxu0 0.0
    %208 = vmatpush1.msra.mxu0 %v185
    %209 = vmatprep.subr.mxu0 0.0
    %210 = vmatpush1.msra.mxu0 %v186
    %211 = vmatprep.subr.mxu0 0.0
    %212 = vmatpush1.msra.mxu0 %v187
    %213 = vmatprep.subr.mxu0 0.0
    %214 = vmatpush1.msra.mxu0 %v188
    %215 = vmatprep.subr.mxu0 0.0
    %216 = vmatpush1.msra.mxu0 %v189
    %217 = vmatprep.subr.mxu0 0.0
    %218 = vmatpush1.msra.mxu0 %v190
    %219 = vmatprep.subr.mxu0 0.0
    %220 = vmatpush1.msra.mxu0 %v191
    %221 = vmatprep.subr.mxu0 0.0
    %222 = vmatpush1.msra.mxu0 0.0
    %223 = vmatprep.subr.mxu0 0.0
    %224 = vmatpush1.msra.mxu0 0.0
    %225 = vmatprep.subr.mxu0 0.0
    %226 = vmatpush1.msra.mxu0 0.0
    %227 = vmatprep.subr.mxu0 0.0
    %228 = vmatpush1.msra.mxu0 0.0
    %229 = vmatprep.subr.mxu0 0.0
    %230 = vmatpush1.msra.mxu0 0.0
    %231 = vmatprep.subr.mxu0 0.0
    %232 = vmatpush1.msra.mxu0 0.0
    %233 = vmatprep.subr.mxu0 0.0
    %234 = vmatpush1.msra.mxu0 0.0
    %235 = vmatprep.subr.mxu0 0.0
    %236 = vmatpush1.msra.mxu0 0.0
    %237 = vmatprep.subr.mxu0 0.0
    %238 = vmatpush1.msra.mxu0 0.0
    %239 = vmatprep.subr.mxu0 0.0
    %240 = vmatpush1.msra.mxu0 0.0
    %241 = vmatprep.subr.mxu0 0.0
    %242 = vmatpush1.msra.mxu0 0.0
    %243 = vmatprep.subr.mxu0 0.0
    %244 = vmatpush1.msra.mxu0 0.0
    %245 = vmatprep.subr.mxu0 0.0
    %246 = vmatpush1.msra.mxu0 0.0
    %247 = vmatprep.subr.mxu0 0.0
    %248 = vmatpush1.msra.mxu0 0.0
    %249 = vmatprep.subr.mxu0 0.0
    %250 = vmatpush1.msra.mxu0 0.0
    %251 = vmatprep.subr.mxu0 0.0
    %252 = vmatpush1.msra.mxu0 0.0
    %253 = vmatprep.subr.mxu0 0.0
    %254 = vmatpush1.msra.mxu0 0.0
    %255 = vmatprep.subr.mxu0 0.0
    %256 = vmatpush1.msra.mxu0 0.0
    %257 = vmatprep.subr.mxu0 0.0
    %258 = vmatpush1.msra.mxu0 0.0
    %259 = vmatprep.subr.mxu0 0.0
    %260 = vmatpush1.msra.mxu0 0.0
    %261 = vmatprep.subr.mxu0 0.0
    %262 = vmatpush1.msra.mxu0 0.0
    %263 = vmatprep.subr.mxu0 0.0
    %264 = vmatpush1.msra.mxu0 0.0
    %265 = vmatprep.subr.mxu0 0.0
    %266 = vmatpush1.msra.mxu0 0.0
    %267 = vmatprep.subr.mxu0 0.0
    %268 = vmatpush1.msra.mxu0 0.0
    %269 = vmatprep.mubr.f32.mxu0 0.0
    %270 = vmatmul.mubr.f32.gmra.mrb[0].mxu0 %v194
    %v271 = vpop.f32.mrb[0].mxu0
    %v272 = vadd.f32 0.0, %v271
    %v273 = vpop.f32.mrb[0].mxu0
    %274 = vmatprep.mubr.f32.mxu0 0.0
    %275 = vmatmul.mubr.f32.gmra.mrb[0].mxu0 %v197
    %v276 = vpop.f32.mrb[0].mxu0
    %v277 = vadd.f32 0.0, %v276
    %v278 = vpop.f32.mrb[0].mxu0
    %279 = vmatprep.mubr.f32.mxu0 0.0
    %280 = vmatmul.mubr.f32.gmra.mrb[0].mxu0 %v200
    %v281 = vpop.f32.mrb[0].mxu0
    %v282 = vadd.f32 0.0, %v281
    %v283 = vpop.f32.mrb[0].mxu0
    %284 = vmatprep.mubr.f32.mxu0 0.0
    %285 = vmatmul.mubr.f32.gmra.mrb[0].mxu0 %v203
    %v286 = vpop.f32.mrb[0].mxu0
    %v287 = vadd.f32 0.0, %v286
    %v288 = vpop.f32.mrb[0].mxu0
    %289 = vdwg.mxu0
    %v291 = vsel %vm192, %v101, 0
    %v294 = vsel %vm192, %v102, 0
    %v297 = vsel %vm192, %v103, 0
    %v300 = vsel %vm192, %v104, 0
    %302 = vmatprep.subr.mxu0 0.0
    %303 = vmatpush1.msra.mxu0 %v159
    %304 = vmatprep.subr.mxu0 0.0
    %305 = vmatpush1.msra.mxu0 %v160
    %306 = vmatprep.subr.mxu0 0.0
    %307 = vmatpush1.msra.mxu0 %v161
    %308 = vmatprep.subr.mxu0 0.0
    %309 = vmatpush1.msra.mxu0 %v162
    %310 = vmatprep.subr.mxu0 0.0
    %311 = vmatpush1.msra.mxu0 %v163
    %312 = vmatprep.subr.mxu0 0.0
    %313 = vmatpush1.msra.mxu0 %v164
    %314 = vmatprep.subr.mxu0 0.0
    %315 = vmatpush1.msra.mxu0 %v165
    %316 = vmatprep.subr.mxu0 0.0
    %317 = vmatpush1.msra.mxu0 %v166
    %318 = vmatprep.subr.mxu0 0.0
    %319 = vmatpush1.msra.mxu0 0.0
    %320 = vmatprep.subr.mxu0 0.0
    %321 = vmatpush1.msra.mxu0 0.0
    %322 = vmatprep.subr.mxu0 0.0
    %323 = vmatpush1.msra.mxu0 0.0
    %324 = vmatprep.subr.mxu0 0.0
    %325 = vmatpush1.msra.mxu0 0.0
    %326 = vmatprep.subr.mxu0 0.0
    %327 = vmatpush1.msra.mxu0 0.0
    %328 = vmatprep.subr.mxu0 0.0
    %329 = vmatpush1.msra.mxu0 0.0
    %330 = vmatprep.subr.mxu0 0.0
    %331 = vmatpush1.msra.mxu0 0.0
    %332 = vmatprep.subr.mxu0 0.0
    %333 = vmatpush1.msra.mxu0 0.0
    %334 = vmatprep.subr.mxu0 0.0
    %335 = vmatpush1.msra.mxu0 0.0
    %336 = vmatprep.subr.mxu0 0.0
    %337 = vmatpush1.msra.mxu0 0.0
    %338 = vmatprep.subr.mxu0 0.0
    %339 = vmatpush1.msra.mxu0 0.0
    %340 = vmatprep.subr.mxu0 0.0
    %341 = vmatpush1.msra.mxu0 0.0
    %342 = vmatprep.subr.mxu0 0.0
    %343 = vmatpush1.msra.mxu0 0.0
    %344 = vmatprep.subr.mxu0 0.0
    %345 = vmatpush1.msra.mxu0 0.0
    %346 = vmatprep.subr.mxu0 0.0
    %347 = vmatpush1.msra.mxu0 0.0
    %348 = vmatprep.subr.mxu0 0.0
    %349 = vmatpush1.msra.mxu0 0.0
    %350 = vmatprep.subr.mxu0 0.0
    %351 = vmatpush1.msra.mxu0 0.0
    %352 = vmatprep.subr.mxu0 0.0
    %353 = vmatpush1.msra.mxu0 0.0
    %354 = vmatprep.subr.mxu0 0.0
    %355 = vmatpush1.msra.mxu0 0.0
    %356 = vmatprep.subr.mxu0 0.0
    %357 = vmatpush1.msra.mxu0 0.0
    %358 = vmatprep.subr.mxu0 0.0
    %359 = vmatpush1.msra.mxu0 0.0
    %360 = vmatprep.subr.mxu0 0.0
    %361 = vmatpush1.msra.mxu0 0.0
    %362 = vmatprep.subr.mxu0 0.0
    %363 = vmatpush1.msra.mxu0 0.0
    %364 = vmatprep.subr.mxu0 0.0
    %365 = vmatpush1.msra.mxu0 0.0
    %366 = vmatprep.mubr.f32.mxu0 0.0
    %367 = vmatmul.mubr.f32.gmra.mrb[0].mxu0 %v291
    %v368 = vpop.f32.mrb[0].mxu0
    %v369 = vadd.f32 %v272, %v368
    %v370 = vpop.f32.mrb[0].mxu0
    %371 = vmatprep.mubr.f32.mxu0 0.0
    %372 = vmatmul.mubr.f32.gmra.mrb[0].mxu0 %v294
    %v373 = vpop.f32.mrb[0].mxu0
    %v374 = vadd.f32 %v277, %v373
    %v375 = vpop.f32.mrb[0].mxu0
    %376 = vmatprep.mubr.f32.mxu0 0.0
    %377 = vmatmul.mubr.f32.gmra.mrb[0].mxu0 %v297
    %v378 = vpop.f32.mrb[0].mxu0
    %v379 = vadd.f32 %v282, %v378
    %v380 = vpop.f32.mrb[0].mxu0
    %381 = vmatprep.mubr.f32.mxu0 0.0
    %382 = vmatmul.mubr.f32.gmra.mrb[0].mxu0 %v300
    %v383 = vpop.f32.mrb[0].mxu0
    %v384 = vadd.f32 %v287, %v383
    %v385 = vpop.f32.mrb[0].mxu0
    %386 = vdwg.mxu0
    %vm387 = vcmp.ne.s32.totalorder %v154, 15
    %vm388 = vcmp.ne.s32.totalorder %v155, 15
    %vm389 = vcmp.ne.s32.totalorder %v156, 15
    %vm390 = vcmp.ne.s32.totalorder %v157, 15
    %v391 = vrot.slane %v101, 1
    %v392 = vrot.slane %v102, 1
    %v393 = vrot.slane %v103, 1
    %v394 = vrot.slane %v104, 1
    %vm395 = vcmp.lt.s32.totalorder %v106, 7
    %v396 = vsel %vm395, %v393, %v394
    %v397 = vsel %vm395, %v392, %v393
    %v398 = vsel %vm395, %v391, %v392
    %v399 = vsel %vm395, %v394, %v391
    %v400 = vsel %vm387, %v398, 0.0
    %v401 = vsel %vm388, %v397, 0.0
    %v402 = vsel %vm389, %v396, 0.0
    %v403 = vsel %vm390, %v399, 0.0
    %s404 = scalar_lea.vmem [#allocation5], 128
    %v405 = vld [vmem:[%s404] sm:$0xff]
    %v406 = vld [vmem:[%s404 + $0x8] sm:$0xff]
    %v407 = vld [vmem:[%s404 + $0x10] sm:$0xff]
    %v408 = vld [vmem:[%s404 + $0x18] sm:$0xff]
    %v409 = vld [vmem:[%s404 + $0x20] sm:$0xff]
    %v410 = vld [vmem:[%s404 + $0x28] sm:$0xff]
    %v411 = vld [vmem:[%s404 + $0x30] sm:$0xff]
    %v412 = vld [vmem:[%s404 + $0x38] sm:$0xff]
    %v414 = vsel %vm192, %v400, 0
    %v417 = vsel %vm192, %v401, 0
    %v420 = vsel %vm192, %v402, 0
    %v423 = vsel %vm192, %v403, 0
    %425 = vmatprep.subr.mxu0 0.0
    %426 = vmatpush1.msra.mxu0 %v405
    %427 = vmatprep.subr.mxu0 0.0
    %428 = vmatpush1.msra.mxu0 %v406
    %429 = vmatprep.subr.mxu0 0.0
    %430 = vmatpush1.msra.mxu0 %v407
    %431 = vmatprep.subr.mxu0 0.0
    %432 = vmatpush1.msra.mxu0 %v408
    %433 = vmatprep.subr.mxu0 0.0
    %434 = vmatpush1.msra.mxu0 %v409
    %435 = vmatprep.subr.mxu0 0.0
    %436 = vmatpush1.msra.mxu0 %v410
    %437 = vmatprep.subr.mxu0 0.0
    %438 = vmatpush1.msra.mxu0 %v411
    %439 = vmatprep.subr.mxu0 0.0
    %440 = vmatpush1.msra.mxu0 %v412
    %441 = vmatprep.subr.mxu0 0.0
    %442 = vmatpush1.msra.mxu0 0.0
    %443 = vmatprep.subr.mxu0 0.0
    %444 = vmatpush1.msra.mxu0 0.0
    %445 = vmatprep.subr.mxu0 0.0
    %446 = vmatpush1.msra.mxu0 0.0
    %447 = vmatprep.subr.mxu0 0.0
    %448 = vmatpush1.msra.mxu0 0.0
    %449 = vmatprep.subr.mxu0 0.0
    %450 = vmatpush1.msra.mxu0 0.0
    %451 = vmatprep.subr.mxu0 0.0
    %452 = vmatpush1.msra.mxu0 0.0
    %453 = vmatprep.subr.mxu0 0.0
    %454 = vmatpush1.msra.mxu0 0.0
    %455 = vmatprep.subr.mxu0 0.0
    %456 = vmatpush1.msra.mxu0 0.0
    %457 = vmatprep.subr.mxu0 0.0
    %458 = vmatpush1.msra.mxu0 0.0
    %459 = vmatprep.subr.mxu0 0.0
    %460 = vmatpush1.msra.mxu0 0.0
    %461 = vmatprep.subr.mxu0 0.0
    %462 = vmatpush1.msra.mxu0 0.0
    %463 = vmatprep.subr.mxu0 0.0
    %464 = vmatpush1.msra.mxu0 0.0
    %465 = vmatprep.subr.mxu0 0.0
    %466 = vmatpush1.msra.mxu0 0.0
    %467 = vmatprep.subr.mxu0 0.0
    %468 = vmatpush1.msra.mxu0 0.0
    %469 = vmatprep.subr.mxu0 0.0
    %470 = vmatpush1.msra.mxu0 0.0
    %471 = vmatprep.subr.mxu0 0.0
    %472 = vmatpush1.msra.mxu0 0.0
    %473 = vmatprep.subr.mxu0 0.0
    %474 = vmatpush1.msra.mxu0 0.0
    %475 = vmatprep.subr.mxu0 0.0
    %476 = vmatpush1.msra.mxu0 0.0
    %477 = vmatprep.subr.mxu0 0.0
    %478 = vmatpush1.msra.mxu0 0.0
    %479 = vmatprep.subr.mxu0 0.0
    %480 = vmatpush1.msra.mxu0 0.0
    %481 = vmatprep.subr.mxu0 0.0
    %482 = vmatpush1.msra.mxu0 0.0
    %483 = vmatprep.subr.mxu0 0.0
    %484 = vmatpush1.msra.mxu0 0.0
    %485 = vmatprep.subr.mxu0 0.0
    %486 = vmatpush1.msra.mxu0 0.0
    %487 = vmatprep.subr.mxu0 0.0
    %488 = vmatpush1.msra.mxu0 0.0
    %489 = vmatprep.mubr.f32.mxu0 0.0
    %490 = vmatmul.mubr.f32.gmra.mrb[0].mxu0 %v414
    %v491 = vpop.f32.mrb[0].mxu0
    %v492 = vadd.f32 0.0, %v491
    %v493 = vpop.f32.mrb[0].mxu0
    %494 = vmatprep.mubr.f32.mxu0 0.0
    %495 = vmatmul.mubr.f32.gmra.mrb[0].mxu0 %v417
    %v496 = vpop.f32.mrb[0].mxu0
    %v497 = vadd.f32 0.0, %v496
    %v498 = vpop.f32.mrb[0].mxu0
    %499 = vmatprep.mubr.f32.mxu0 0.0
    %500 = vmatmul.mubr.f32.gmra.mrb[0].mxu0 %v420
    %v501 = vpop.f32.mrb[0].mxu0
    %v502 = vadd.f32 0.0, %v501
    %v503 = vpop.f32.mrb[0].mxu0
    %504 = vmatprep.mubr.f32.mxu0 0.0
    %505 = vmatmul.mubr.f32.gmra.mrb[0].mxu0 %v423
    %v506 = vpop.f32.mrb[0].mxu0
    %v507 = vadd.f32 0.0, %v506
    %v508 = vpop.f32.mrb[0].mxu0
    %509 = vdwg.mxu0
    %v510 = vadd.f32 %v369, %v492
    %v511 = vadd.f32 %v374, %v497
    %v512 = vadd.f32 %v379, %v502
    %v513 = vadd.f32 %v384, %v507
    %v514 = vld [vmem:[%s4] sm:$0x1]
    %v515 = vld [vmem:[%s5] sm:$0x1]
    %v516 = vmul.f32 %v510, %v510
    %v517 = vmul.f32 %v511, %v511
    %v518 = vmul.f32 %v512, %v512
    %v519 = vmul.f32 %v513, %v513
    %v520 = vadd.f32 %v510, %v511
    %v521 = vadd.f32 %v520, %v512
    %v522 = vadd.f32 %v521, %v513
    %v523 = vrot.slane %v522, 4
    %v524 = vadd.f32 %v522, %v523
    %v525 = vrot.slane %v524, 2
    %v526 = vadd.f32 %v524, %v525
    %v527 = vrot.slane %v526, 1
    %v528 = vadd.f32 %v526, %v527
    %v529 = vadd.f32 %v516, %v517
    %v530 = vadd.f32 %v529, %v518
    %v531 = vadd.f32 %v530, %v519
    %v532 = vrot.slane %v531, 4
    %v533 = vadd.f32 %v531, %v532
    %v534 = vrot.slane %v533, 2
    %v535 = vadd.f32 %v533, %v534
    %v536 = vrot.slane %v535, 1
    %v537 = vadd.f32 %v535, %v536
    %538 = vmatprep.subr.mxu0 0.0
    %539 = vmatpush1.msra.mxu0 %v85
    %540 = vmatprep.subr.mxu0 0.0
    %541 = vmatpush1.msra.mxu0 %v86
    %542 = vmatprep.subr.mxu0 0.0
    %543 = vmatpush1.msra.mxu0 %v87
    %544 = vmatprep.subr.mxu0 0.0
    %545 = vmatpush1.msra.mxu0 %v88
    %546 = vmatprep.subr.mxu0 0.0
    %547 = vmatpush1.msra.mxu0 %v89
    %548 = vmatprep.subr.mxu0 0.0
    %549 = vmatpush1.msra.mxu0 %v90
    %550 = vmatprep.subr.mxu0 0.0
    %551 = vmatpush1.msra.mxu0 %v91
    %552 = vmatprep.subr.mxu0 0.0
    %553 = vmatpush1.msra.mxu0 %v92
    %554 = vmatprep.subr.mxu0 0.0
    %555 = vmatpush1.msra.mxu0 %v93
    %556 = vmatprep.subr.mxu0 0.0
    %557 = vmatpush1.msra.mxu0 %v94
    %558 = vmatprep.subr.mxu0 0.0
    %559 = vmatpush1.msra.mxu0 %v95
    %560 = vmatprep.subr.mxu0 0.0
    %561 = vmatpush1.msra.mxu0 %v96
    %562 = vmatprep.subr.mxu0 0.0
    %563 = vmatpush1.msra.mxu0 %v97
    %564 = vmatprep.subr.mxu0 0.0
    %565 = vmatpush1.msra.mxu0 %v98
    %566 = vmatprep.subr.mxu0 0.0
    %567 = vmatpush1.msra.mxu0 %v99
    %568 = vmatprep.subr.mxu0 0.0
    %569 = vmatpush1.msra.mxu0 %v100
    %570 = vmatprep.subr.mxu0 0.0
    %571 = vmatpush1.msra.mxu0 0.0
    %572 = vmatprep.subr.mxu0 0.0
    %573 = vmatpush1.msra.mxu0 0.0
    %574 = vmatprep.subr.mxu0 0.0
    %575 = vmatpush1.msra.mxu0 0.0
    %576 = vmatprep.subr.mxu0 0.0
    %577 = vmatpush1.msra.mxu0 0.0
    %578 = vmatprep.subr.mxu0 0.0
    %579 = vmatpush1.msra.mxu0 0.0
    %580 = vmatprep.subr.mxu0 0.0
    %581 = vmatpush1.msra.mxu0 0.0
    %582 = vmatprep.subr.mxu0 0.0
    %583 = vmatpush1.msra.mxu0 0.0
    %584 = vmatprep.subr.mxu0 0.0
    %585 = vmatpush1.msra.mxu0 0.0
    %586 = vmatprep.subr.mxu0 0.0
    %587 = vmatpush1.msra.mxu0 0.0
    %588 = vmatprep.subr.mxu0 0.0
    %589 = vmatpush1.msra.mxu0 0.0
    %590 = vmatprep.subr.mxu0 0.0
    %591 = vmatpush1.msra.mxu0 0.0
    %592 = vmatprep.subr.mxu0 0.0
    %593 = vmatpush1.msra.mxu0 0.0
    %594 = vmatprep.subr.mxu0 0.0
    %595 = vmatpush1.msra.mxu0 0.0
    %596 = vmatprep.subr.mxu0 0.0
    %597 = vmatpush1.msra.mxu0 0.0
    %598 = vmatprep.subr.mxu0 0.0
    %599 = vmatpush1.msra.mxu0 0.0
    %600 = vmatprep.subr.mxu0 0.0
    %601 = vmatpush1.msra.mxu0 0.0
    %602 = vmatprep.mubr.f32.mxu0 0.0
    %603 = vmatmul.mubr.f32.gmra.mrb[0].mxu0 %v528
    %v604 = vpop.f32.mrb[0].mxu0
    %v605 = vadd.f32 0.0, %v604
    %v606 = vpop.f32.mrb[0].mxu0
    %607 = vdwg.mxu0
    %608 = vmatprep.subr.mxu0 0.0
    %609 = vmatpush1.msra.mxu0 %v85
    %610 = vmatprep.subr.mxu0 0.0
    %611 = vmatpush1.msra.mxu0 %v86
    %612 = vmatprep.subr.mxu0 0.0
    %613 = vmatpush1.msra.mxu0 %v87
    %614 = vmatprep.subr.mxu0 0.0
    %615 = vmatpush1.msra.mxu0 %v88
    %616 = vmatprep.subr.mxu0 0.0
    %617 = vmatpush1.msra.mxu0 %v89
    %618 = vmatprep.subr.mxu0 0.0
    %619 = vmatpush1.msra.mxu0 %v90
    %620 = vmatprep.subr.mxu0 0.0
    %621 = vmatpush1.msra.mxu0 %v91
    %622 = vmatprep.subr.mxu0 0.0
    %623 = vmatpush1.msra.mxu0 %v92
    %624 = vmatprep.subr.mxu0 0.0
    %625 = vmatpush1.msra.mxu0 %v93
    %626 = vmatprep.subr.mxu0 0.0
    %627 = vmatpush1.msra.mxu0 %v94
    %628 = vmatprep.subr.mxu0 0.0
    %629 = vmatpush1.msra.mxu0 %v95
    %630 = vmatprep.subr.mxu0 0.0
    %631 = vmatpush1.msra.mxu0 %v96
    %632 = vmatprep.subr.mxu0 0.0
    %633 = vmatpush1.msra.mxu0 %v97
    %634 = vmatprep.subr.mxu0 0.0
    %635 = vmatpush1.msra.mxu0 %v98
    %636 = vmatprep.subr.mxu0 0.0
    %637 = vmatpush1.msra.mxu0 %v99
    %638 = vmatprep.subr.mxu0 0.0
    %639 = vmatpush1.msra.mxu0 %v100
    %640 = vmatprep.subr.mxu0 0.0
    %641 = vmatpush1.msra.mxu0 0.0
    %642 = vmatprep.subr.mxu0 0.0
    %643 = vmatpush1.msra.mxu0 0.0
    %644 = vmatprep.subr.mxu0 0.0
    %645 = vmatpush1.msra.mxu0 0.0
    %646 = vmatprep.subr.mxu0 0.0
    %647 = vmatpush1.msra.mxu0 0.0
    %648 = vmatprep.subr.mxu0 0.0
    %649 = vmatpush1.msra.mxu0 0.0
    %650 = vmatprep.subr.mxu0 0.0
    %651 = vmatpush1.msra.mxu0 0.0
    %652 = vmatprep.subr.mxu0 0.0
    %653 = vmatpush1.msra.mxu0 0.0
    %654 = vmatprep.subr.mxu0 0.0
    %655 = vmatpush1.msra.mxu0 0.0
    %656 = vmatprep.subr.mxu0 0.0
    %657 = vmatpush1.msra.mxu0 0.0
    %658 = vmatprep.subr.mxu0 0.0
    %659 = vmatpush1.msra.mxu0 0.0
    %660 = vmatprep.subr.mxu0 0.0
    %661 = vmatpush1.msra.mxu0 0.0
    %662 = vmatprep.subr.mxu0 0.0
    %663 = vmatpush1.msra.mxu0 0.0
    %664 = vmatprep.subr.mxu0 0.0
    %665 = vmatpush1.msra.mxu0 0.0
    %666 = vmatprep.subr.mxu0 0.0
    %667 = vmatpush1.msra.mxu0 0.0
    %668 = vmatprep.subr.mxu0 0.0
    %669 = vmatpush1.msra.mxu0 0.0
    %670 = vmatprep.subr.mxu0 0.0
    %671 = vmatpush1.msra.mxu0 0.0
    %672 = vmatprep.mubr.f32.mxu0 0.0
    %673 = vmatmul.mubr.f32.gmra.mrb[0].mxu0 %v537
    %v674 = vpop.f32.mrb[0].mxu0
    %v675 = vadd.f32 0.0, %v674
    %v676 = vpop.f32.mrb[0].mxu0
    %677 = vdwg.mxu0
    %v678 = vmul.f32 %v605, %v605
    %v679 = vsub.f32 %v675, %v678
    %v680 = vmax.f32 %v679, 0.0
    %v681 = vlaneseq
    %v682 = vshrl.u32 %v681, 7
    %v683 = vsub.s32 0, %v682
    %v684 = vrot.slane %v605, %v683
    %v685 = vsub.f32 %v510, %v684
    %v686 = vsub.f32 %v511, %v684
    %v687 = vsub.f32 %v512, %v684
    %v688 = vsub.f32 %v513, %v684
    %v689 = vadd.f32 %v680, 1e-05
    %v690 = vrsqrt.pop %v689
    %v691 = vmul.f32 %v514, %v690
    %v693 = vlaneseq
    %v694 = vshrl.u32 %v693, 7
    %v695 = vsub.s32 0, %v694
    %v696 = vrot.slane %v691, %v695
    %v698 = vmul.f32 %v685, %v696
    %v699 = vmul.f32 %v686, %v696
    %v700 = vmul.f32 %v687, %v696
    %v701 = vmul.f32 %v688, %v696
    %v703 = vlaneseq
    %v704 = vshrl.u32 %v703, 7
    %v705 = vsub.s32 0, %v704
    %v706 = vrot.slane %v515, %v705
    %v708 = vadd.f32 %v698, %v706
    %v709 = vadd.f32 %v699, %v706
    %v710 = vadd.f32 %v700, %v706
    %v711 = vadd.f32 %v701, %v706
    %v712 = vmax.f32 %v708, 0.0
    %v713 = vmax.f32 %v709, 0.0
    %v714 = vmax.f32 %v710, 0.0
    %v715 = vmax.f32 %v711, 0.0
    %s716 = scalar_lea.vmem [#allocation7], 128
    %v717 = vld [vmem:[%s716] sm:$0xff]
    %v718 = vld [vmem:[%s716 + $0x8] sm:$0xff]
    %v719 = vld [vmem:[%s716 + $0x10] sm:$0xff]
    %v720 = vld [vmem:[%s716 + $0x18] sm:$0xff]
    %v721 = vld [vmem:[%s716 + $0x20] sm:$0xff]
    %v722 = vld [vmem:[%s716 + $0x28] sm:$0xff]
    %v723 = vld [vmem:[%s716 + $0x30] sm:$0xff]
    %v724 = vld [vmem:[%s716 + $0x38] sm:$0xff]
    %v725 = vld [vmem:[%s716 + $0x40] sm:$0xff]
    %v726 = vld [vmem:[%s716 + $0x48] sm:$0xff]
    %v727 = vld [vmem:[%s716 + $0x50] sm:$0xff]
    %v728 = vld [vmem:[%s716 + $0x58] sm:$0xff]
    %v729 = vld [vmem:[%s716 + $0x60] sm:$0xff]
    %v730 = vld [vmem:[%s716 + $0x68] sm:$0xff]
    %v731 = vld [vmem:[%s716 + $0x70] sm:$0xff]
    %v732 = vld [vmem:[%s716 + $0x78] sm:$0xff]
    %v733 = vrot.slane %v712, 7
    %v734 = vrot.slane %v713, 7
    %v735 = vrot.slane %v714, 7
    %v736 = vrot.slane %v715, 7
    %v737 = vsel %vm175, %v735, %v736
    %v738 = vsel %vm175, %v734, %v735
    %v739 = vsel %vm175, %v733, %v734
    %v740 = vsel %vm175, %v736, %v733
    %v741 = vsel %vm167, %v740, 0.0
    %v742 = vsel %vm168, %v739, 0.0
    %v743 = vsel %vm169, %v738, 0.0
    %v744 = vsel %vm170, %v737, 0.0
    %v745 = vld [vmem:[#allocation7] sm:$0xff]
    %v746 = vld [vmem:[#allocation7 + $0x8] sm:$0xff]
    %v747 = vld [vmem:[#allocation7 + $0x10] sm:$0xff]
    %v748 = vld [vmem:[#allocation7 + $0x18] sm:$0xff]
    %v749 = vld [vmem:[#allocation7 + $0x20] sm:$0xff]
    %v750 = vld [vmem:[#allocation7 + $0x28] sm:$0xff]
    %v751 = vld [vmem:[#allocation7 + $0x30] sm:$0xff]
    %v752 = vld [vmem:[#allocation7 + $0x38] sm:$0xff]
    %v753 = vld [vmem:[#allocation7 + $0x40] sm:$0xff]
    %v754 = vld [vmem:[#allocation7 + $0x48] sm:$0xff]
    %v755 = vld [vmem:[#allocation7 + $0x50] sm:$0xff]
    %v756 = vld [vmem:[#allocation7 + $0x58] sm:$0xff]
    %v757 = vld [vmem:[#allocation7 + $0x60] sm:$0xff]
    %v758 = vld [vmem:[#allocation7 + $0x68] sm:$0xff]
    %v759 = vld [vmem:[#allocation7 + $0x70] sm:$0xff]
    %v760 = vld [vmem:[#allocation7 + $0x78] sm:$0xff]
    %761 = vmatprep.subr.mxu0 0.0
    %762 = vmatpush1.msra.mxu0 %v745
    %763 = vmatprep.subr.mxu0 0.0
    %764 = vmatpush1.msra.mxu0 %v746
    %765 = vmatprep.subr.mxu0 0.0
    %766 = vmatpush1.msra.mxu0 %v747
    %767 = vmatprep.subr.mxu0 0.0
    %768 = vmatpush1.msra.mxu0 %v748
    %769 = vmatprep.subr.mxu0 0.0
    %770 = vmatpush1.msra.mxu0 %v749
    %771 = vmatprep.subr.mxu0 0.0
    %772 = vmatpush1.msra.mxu0 %v750
    %773 = vmatprep.subr.mxu0 0.0
    %774 = vmatpush1.msra.mxu0 %v751
    %775 = vmatprep.subr.mxu0 0.0
    %776 = vmatpush1.msra.mxu0 %v752
    %777 = vmatprep.subr.mxu0 0.0
    %778 = vmatpush1.msra.mxu0 %v753
    %779 = vmatprep.subr.mxu0 0.0
    %780 = vmatpush1.msra.mxu0 %v754
    %781 = vmatprep.subr.mxu0 0.0
    %782 = vmatpush1.msra.mxu0 %v755
    %783 = vmatprep.subr.mxu0 0.0
    %784 = vmatpush1.msra.mxu0 %v756
    %785 = vmatprep.subr.mxu0 0.0
    %786 = vmatpush1.msra.mxu0 %v757
    %787 = vmatprep.subr.mxu0 0.0
    %788 = vmatpush1.msra.mxu0 %v758
    %789 = vmatprep.subr.mxu0 0.0
    %790 = vmatpush1.msra.mxu0 %v759
    %791 = vmatprep.subr.mxu0 0.0
    %792 = vmatpush1.msra.mxu0 %v760
    %793 = vmatprep.subr.mxu0 0.0
    %794 = vmatpush1.msra.mxu0 0.0
    %795 = vmatprep.subr.mxu0 0.0
    %796 = vmatpush1.msra.mxu0 0.0
    %797 = vmatprep.subr.mxu0 0.0
    %798 = vmatpush1.msra.mxu0 0.0
    %799 = vmatprep.subr.mxu0 0.0
    %800 = vmatpush1.msra.mxu0 0.0
    %801 = vmatprep.subr.mxu0 0.0
    %802 = vmatpush1.msra.mxu0 0.0
    %803 = vmatprep.subr.mxu0 0.0
    %804 = vmatpush1.msra.mxu0 0.0
    %805 = vmatprep.subr.mxu0 0.0
    %806 = vmatpush1.msra.mxu0 0.0
    %807 = vmatprep.subr.mxu0 0.0
    %808 = vmatpush1.msra.mxu0 0.0
    %809 = vmatprep.subr.mxu0 0.0
    %810 = vmatpush1.msra.mxu0 0.0
    %811 = vmatprep.subr.mxu0 0.0
    %812 = vmatpush1.msra.mxu0 0.0
    %813 = vmatprep.subr.mxu0 0.0
    %814 = vmatpush1.msra.mxu0 0.0
    %815 = vmatprep.subr.mxu0 0.0
    %816 = vmatpush1.msra.mxu0 0.0
    %817 = vmatprep.subr.mxu0 0.0
    %818 = vmatpush1.msra.mxu0 0.0
    %819 = vmatprep.subr.mxu0 0.0
    %820 = vmatpush1.msra.mxu0 0.0
    %821 = vmatprep.subr.mxu0 0.0
    %822 = vmatpush1.msra.mxu0 0.0
    %823 = vmatprep.subr.mxu0 0.0
    %824 = vmatpush1.msra.mxu0 0.0
    %825 = vmatprep.mubr.f32.mxu0 0.0
    %826 = vmatmul.mubr.f32.gmra.mrb[0].mxu0 %v741
    %v827 = vpop.f32.mrb[0].mxu0
    %v828 = vadd.f32 0.0, %v827
    %v829 = vpop.f32.mrb[0].mxu0
    %830 = vmatprep.mubr.f32.mxu0 0.0
    %831 = vmatmul.mubr.f32.gmra.mrb[0].mxu0 %v742
    %v832 = vpop.f32.mrb[0].mxu0
    %v833 = vadd.f32 0.0, %v832
    %v834 = vpop.f32.mrb[0].mxu0
    %835 = vmatprep.mubr.f32.mxu0 0.0
    %836 = vmatmul.mubr.f32.gmra.mrb[0].mxu0 %v743
    %v837 = vpop.f32.mrb[0].mxu0
    %v838 = vadd.f32 0.0, %v837
    %v839 = vpop.f32.mrb[0].mxu0
    %840 = vmatprep.mubr.f32.mxu0 0.0
    %841 = vmatmul.mubr.f32.gmra.mrb[0].mxu0 %v744
    %v842 = vpop.f32.mrb[0].mxu0
    %v843 = vadd.f32 0.0, %v842
    %v844 = vpop.f32.mrb[0].mxu0
    %845 = vdwg.mxu0
    %846 = vmatprep.subr.mxu0 0.0
    %847 = vmatpush1.msra.mxu0 %v717
    %848 = vmatprep.subr.mxu0 0.0
    %849 = vmatpush1.msra.mxu0 %v718
    %850 = vmatprep.subr.mxu0 0.0
    %851 = vmatpush1.msra.mxu0 %v719
    %852 = vmatprep.subr.mxu0 0.0
    %853 = vmatpush1.msra.mxu0 %v720
    %854 = vmatprep.subr.mxu0 0.0
    %855 = vmatpush1.msra.mxu0 %v721
    %856 = vmatprep.subr.mxu0 0.0
    %857 = vmatpush1.msra.mxu0 %v722
    %858 = vmatprep.subr.mxu0 0.0
    %859 = vmatpush1.msra.mxu0 %v723
    %860 = vmatprep.subr.mxu0 0.0
    %861 = vmatpush1.msra.mxu0 %v724
    %862 = vmatprep.subr.mxu0 0.0
    %863 = vmatpush1.msra.mxu0 %v725
    %864 = vmatprep.subr.mxu0 0.0
    %865 = vmatpush1.msra.mxu0 %v726
    %866 = vmatprep.subr.mxu0 0.0
    %867 = vmatpush1.msra.mxu0 %v727
    %868 = vmatprep.subr.mxu0 0.0
    %869 = vmatpush1.msra.mxu0 %v728
    %870 = vmatprep.subr.mxu0 0.0
    %871 = vmatpush1.msra.mxu0 %v729
    %872 = vmatprep.subr.mxu0 0.0
    %873 = vmatpush1.msra.mxu0 %v730
    %874 = vmatprep.subr.mxu0 0.0
    %875 = vmatpush1.msra.mxu0 %v731
    %876 = vmatprep.subr.mxu0 0.0
    %877 = vmatpush1.msra.mxu0 %v732
    %878 = vmatprep.subr.mxu0 0.0
    %879 = vmatpush1.msra.mxu0 0.0
    %880 = vmatprep.subr.mxu0 0.0
    %881 = vmatpush1.msra.mxu0 0.0
    %882 = vmatprep.subr.mxu0 0.0
    %883 = vmatpush1.msra.mxu0 0.0
    %884 = vmatprep.subr.mxu0 0.0
    %885 = vmatpush1.msra.mxu0 0.0
    %886 = vmatprep.subr.mxu0 0.0
    %887 = vmatpush1.msra.mxu0 0.0
    %888 = vmatprep.subr.mxu0 0.0
    %889 = vmatpush1.msra.mxu0 0.0
    %890 = vmatprep.subr.mxu0 0.0
    %891 = vmatpush1.msra.mxu0 0.0
    %892 = vmatprep.subr.mxu0 0.0
    %893 = vmatpush1.msra.mxu0 0.0
    %894 = vmatprep.subr.mxu0 0.0
    %895 = vmatpush1.msra.mxu0 0.0
    %896 = vmatprep.subr.mxu0 0.0
    %897 = vmatpush1.msra.mxu0 0.0
    %898 = vmatprep.subr.mxu0 0.0
    %899 = vmatpush1.msra.mxu0 0.0
    %900 = vmatprep.subr.mxu0 0.0
    %901 = vmatpush1.msra.mxu0 0.0
    %902 = vmatprep.subr.mxu0 0.0
    %903 = vmatpush1.msra.mxu0 0.0
    %904 = vmatprep.subr.mxu0 0.0
    %905 = vmatpush1.msra.mxu0 0.0
    %906 = vmatprep.subr.mxu0 0.0
    %907 = vmatpush1.msra.mxu0 0.0
    %908 = vmatprep.subr.mxu0 0.0
    %909 = vmatpush1.msra.mxu0 0.0
    %910 = vmatprep.mubr.f32.mxu0 0.0
    %911 = vmatmul.mubr.f32.gmra.mrb[0].mxu0 %v712
    %v912 = vpop.f32.mrb[0].mxu0
    %v913 = vadd.f32 %v828, %v912
    %v914 = vpop.f32.mrb[0].mxu0
    %915 = vmatprep.mubr.f32.mxu0 0.0
    %916 = vmatmul.mubr.f32.gmra.mrb[0].mxu0 %v713
    %v917 = vpop.f32.mrb[0].mxu0
    %v918 = vadd.f32 %v833, %v917
    %v919 = vpop.f32.mrb[0].mxu0
    %920 = vmatprep.mubr.f32.mxu0 0.0
    %921 = vmatmul.mubr.f32.gmra.mrb[0].mxu0 %v714
    %v922 = vpop.f32.mrb[0].mxu0
    %v923 = vadd.f32 %v838, %v922
    %v924 = vpop.f32.mrb[0].mxu0
    %925 = vmatprep.mubr.f32.mxu0 0.0
    %926 = vmatmul.mubr.f32.gmra.mrb[0].mxu0 %v715
    %v927 = vpop.f32.mrb[0].mxu0
    %v928 = vadd.f32 %v843, %v927
    %v929 = vpop.f32.mrb[0].mxu0
    %930 = vdwg.mxu0
    %v931 = vrot.slane %v712, 1
    %v932 = vrot.slane %v713, 1
    %v933 = vrot.slane %v714, 1
    %v934 = vrot.slane %v715, 1
    %v935 = vsel %vm395, %v933, %v934
    %v936 = vsel %vm395, %v932, %v933
    %v937 = vsel %vm395, %v931, %v932
    %v938 = vsel %vm395, %v934, %v931
    %v939 = vsel %vm387, %v937, 0.0
    %v940 = vsel %vm388, %v936, 0.0
    %v941 = vsel %vm389, %v935, 0.0
    %v942 = vsel %vm390, %v938, 0.0
    %s943 = scalar_lea.vmem [#allocation7], 256
    %v944 = vld [vmem:[%s943] sm:$0xff]
    %v945 = vld [vmem:[%s943 + $0x8] sm:$0xff]
    %v946 = vld [vmem:[%s943 + $0x10] sm:$0xff]
    %v947 = vld [vmem:[%s943 + $0x18] sm:$0xff]
    %v948 = vld [vmem:[%s943 + $0x20] sm:$0xff]
    %v949 = vld [vmem:[%s943 + $0x28] sm:$0xff]
    %v950 = vld [vmem:[%s943 + $0x30] sm:$0xff]
    %v951 = vld [vmem:[%s943 + $0x38] sm:$0xff]
    %v952 = vld [vmem:[%s943 + $0x40] sm:$0xff]
    %v953 = vld [vmem:[%s943 + $0x48] sm:$0xff]
    %v954 = vld [vmem:[%s943 + $0x50] sm:$0xff]
    %v955 = vld [vmem:[%s943 + $0x58] sm:$0xff]
    %v956 = vld [vmem:[%s943 + $0x60] sm:$0xff]
    %v957 = vld [vmem:[%s943 + $0x68] sm:$0xff]
    %v958 = vld [vmem:[%s943 + $0x70] sm:$0xff]
    %v959 = vld [vmem:[%s943 + $0x78] sm:$0xff]
    %960 = vmatprep.subr.mxu0 0.0
    %961 = vmatpush1.msra.mxu0 %v944
    %962 = vmatprep.subr.mxu0 0.0
    %963 = vmatpush1.msra.mxu0 %v945
    %964 = vmatprep.subr.mxu0 0.0
    %965 = vmatpush1.msra.mxu0 %v946
    %966 = vmatprep.subr.mxu0 0.0
    %967 = vmatpush1.msra.mxu0 %v947
    %968 = vmatprep.subr.mxu0 0.0
    %969 = vmatpush1.msra.mxu0 %v948
    %970 = vmatprep.subr.mxu0 0.0
    %971 = vmatpush1.msra.mxu0 %v949
    %972 = vmatprep.subr.mxu0 0.0
    %973 = vmatpush1.msra.mxu0 %v950
    %974 = vmatprep.subr.mxu0 0.0
    %975 = vmatpush1.msra.mxu0 %v951
    %976 = vmatprep.subr.mxu0 0.0
    %977 = vmatpush1.msra.mxu0 %v952
    %978 = vmatprep.subr.mxu0 0.0
    %979 = vmatpush1.msra.mxu0 %v953
    %980 = vmatprep.subr.mxu0 0.0
    %981 = vmatpush1.msra.mxu0 %v954
    %982 = vmatprep.subr.mxu0 0.0
    %983 = vmatpush1.msra.mxu0 %v955
    %984 = vmatprep.subr.mxu0 0.0
    %985 = vmatpush1.msra.mxu0 %v956
    %986 = vmatprep.subr.mxu0 0.0
    %987 = vmatpush1.msra.mxu0 %v957
    %988 = vmatprep.subr.mxu0 0.0
    %989 = vmatpush1.msra.mxu0 %v958
    %990 = vmatprep.subr.mxu0 0.0
    %991 = vmatpush1.msra.mxu0 %v959
    %992 = vmatprep.subr.mxu0 0.0
    %993 = vmatpush1.msra.mxu0 0.0
    %994 = vmatprep.subr.mxu0 0.0
    %995 = vmatpush1.msra.mxu0 0.0
    %996 = vmatprep.subr.mxu0 0.0
    %997 = vmatpush1.msra.mxu0 0.0
    %998 = vmatprep.subr.mxu0 0.0
    %999 = vmatpush1.msra.mxu0 0.0
    %1000 = vmatprep.subr.mxu0 0.0
    %1001 = vmatpush1.msra.mxu0 0.0
    %1002 = vmatprep.subr.mxu0 0.0
    %1003 = vmatpush1.msra.mxu0 0.0
    %1004 = vmatprep.subr.mxu0 0.0
    %1005 = vmatpush1.msra.mxu0 0.0
    %1006 = vmatprep.subr.mxu0 0.0
    %1007 = vmatpush1.msra.mxu0 0.0
    %1008 = vmatprep.subr.mxu0 0.0
    %1009 = vmatpush1.msra.mxu0 0.0
    %1010 = vmatprep.subr.mxu0 0.0
    %1011 = vmatpush1.msra.mxu0 0.0
    %1012 = vmatprep.subr.mxu0 0.0
    %1013 = vmatpush1.msra.mxu0 0.0
    %1014 = vmatprep.subr.mxu0 0.0
    %1015 = vmatpush1.msra.mxu0 0.0
    %1016 = vmatprep.subr.mxu0 0.0
    %1017 = vmatpush1.msra.mxu0 0.0
    %1018 = vmatprep.subr.mxu0 0.0
    %1019 = vmatpush1.msra.mxu0 0.0
    %1020 = vmatprep.subr.mxu0 0.0
    %1021 = vmatpush1.msra.mxu0 0.0
    %1022 = vmatprep.subr.mxu0 0.0
    %1023 = vmatpush1.msra.mxu0 0.0
    %1024 = vmatprep.mubr.f32.mxu0 0.0
    %1025 = vmatmul.mubr.f32.gmra.mrb[0].mxu0 %v939
    %v1026 = vpop.f32.mrb[0].mxu0
    %v1027 = vadd.f32 0.0, %v1026
    %v1028 = vpop.f32.mrb[0].mxu0
    %1029 = vmatprep.mubr.f32.mxu0 0.0
    %1030 = vmatmul.mubr.f32.gmra.mrb[0].mxu0 %v940
    %v1031 = vpop.f32.mrb[0].mxu0
    %v1032 = vadd.f32 0.0, %v1031
    %v1033 = vpop.f32.mrb[0].mxu0
    %1034 = vmatprep.mubr.f32.mxu0 0.0
    %1035 = vmatmul.mubr.f32.gmra.mrb[0].mxu0 %v941
    %v1036 = vpop.f32.mrb[0].mxu0
    %v1037 = vadd.f32 0.0, %v1036
    %v1038 = vpop.f32.mrb[0].mxu0
    %1039 = vmatprep.mubr.f32.mxu0 0.0
    %1040 = vmatmul.mubr.f32.gmra.mrb[0].mxu0 %v942
    %v1041 = vpop.f32.mrb[0].mxu0
    %v1042 = vadd.f32 0.0, %v1041
    %v1043 = vpop.f32.mrb[0].mxu0
    %1044 = vdwg.mxu0
    %v1045 = vadd.f32 %v913, %v1027
    %v1046 = vadd.f32 %v918, %v1032
    %v1047 = vadd.f32 %v923, %v1037
    %v1048 = vadd.f32 %v928, %v1042
    %v1049 = vld [vmem:[%s6] sm:$0x1]
    %v1050 = vld [vmem:[%s7] sm:$0x1]
    %v1051 = vmul.f32 %v1045, %v1045
    %v1052 = vmul.f32 %v1046, %v1046
    %v1053 = vmul.f32 %v1047, %v1047
    %v1054 = vmul.f32 %v1048, %v1048
    %v1055 = vadd.f32 %v1045, %v1046
    %v1056 = vadd.f32 %v1055, %v1047
    %v1057 = vadd.f32 %v1056, %v1048
    %v1058 = vrot.slane %v1057, 4
    %v1059 = vadd.f32 %v1057, %v1058
    %v1060 = vrot.slane %v1059, 2
    %v1061 = vadd.f32 %v1059, %v1060
    %v1062 = vrot.slane %v1061, 1
    %v1063 = vadd.f32 %v1061, %v1062
    %v1064 = vadd.f32 %v1051, %v1052
    %v1065 = vadd.f32 %v1064, %v1053
    %v1066 = vadd.f32 %v1065, %v1054
    %v1067 = vrot.slane %v1066, 4
    %v1068 = vadd.f32 %v1066, %v1067
    %v1069 = vrot.slane %v1068, 2
    %v1070 = vadd.f32 %v1068, %v1069
    %v1071 = vrot.slane %v1070, 1
    %v1072 = vadd.f32 %v1070, %v1071
    %1073 = vmatprep.subr.mxu0 0.0
    %1074 = vmatpush1.msra.mxu0 %v85
    %1075 = vmatprep.subr.mxu0 0.0
    %1076 = vmatpush1.msra.mxu0 %v86
    %1077 = vmatprep.subr.mxu0 0.0
    %1078 = vmatpush1.msra.mxu0 %v87
    %1079 = vmatprep.subr.mxu0 0.0
    %1080 = vmatpush1.msra.mxu0 %v88
    %1081 = vmatprep.subr.mxu0 0.0
    %1082 = vmatpush1.msra.mxu0 %v89
    %1083 = vmatprep.subr.mxu0 0.0
    %1084 = vmatpush1.msra.mxu0 %v90
    %1085 = vmatprep.subr.mxu0 0.0
    %1086 = vmatpush1.msra.mxu0 %v91
    %1087 = vmatprep.subr.mxu0 0.0
    %1088 = vmatpush1.msra.mxu0 %v92
    %1089 = vmatprep.subr.mxu0 0.0
    %1090 = vmatpush1.msra.mxu0 %v93
    %1091 = vmatprep.subr.mxu0 0.0
    %1092 = vmatpush1.msra.mxu0 %v94
    %1093 = vmatprep.subr.mxu0 0.0
    %1094 = vmatpush1.msra.mxu0 %v95
    %1095 = vmatprep.subr.mxu0 0.0
    %1096 = vmatpush1.msra.mxu0 %v96
    %1097 = vmatprep.subr.mxu0 0.0
    %1098 = vmatpush1.msra.mxu0 %v97
    %1099 = vmatprep.subr.mxu0 0.0
    %1100 = vmatpush1.msra.mxu0 %v98
    %1101 = vmatprep.subr.mxu0 0.0
    %1102 = vmatpush1.msra.mxu0 %v99
    %1103 = vmatprep.subr.mxu0 0.0
    %1104 = vmatpush1.msra.mxu0 %v100
    %1105 = vmatprep.subr.mxu0 0.0
    %1106 = vmatpush1.msra.mxu0 0.0
    %1107 = vmatprep.subr.mxu0 0.0
    %1108 = vmatpush1.msra.mxu0 0.0
    %1109 = vmatprep.subr.mxu0 0.0
    %1110 = vmatpush1.msra.mxu0 0.0
    %1111 = vmatprep.subr.mxu0 0.0
    %1112 = vmatpush1.msra.mxu0 0.0
    %1113 = vmatprep.subr.mxu0 0.0
    %1114 = vmatpush1.msra.mxu0 0.0
    %1115 = vmatprep.subr.mxu0 0.0
    %1116 = vmatpush1.msra.mxu0 0.0
    %1117 = vmatprep.subr.mxu0 0.0
    %1118 = vmatpush1.msra.mxu0 0.0
    %1119 = vmatprep.subr.mxu0 0.0
    %1120 = vmatpush1.msra.mxu0 0.0
    %1121 = vmatprep.subr.mxu0 0.0
    %1122 = vmatpush1.msra.mxu0 0.0
    %1123 = vmatprep.subr.mxu0 0.0
    %1124 = vmatpush1.msra.mxu0 0.0
    %1125 = vmatprep.subr.mxu0 0.0
    %1126 = vmatpush1.msra.mxu0 0.0
    %1127 = vmatprep.subr.mxu0 0.0
    %1128 = vmatpush1.msra.mxu0 0.0
    %1129 = vmatprep.subr.mxu0 0.0
    %1130 = vmatpush1.msra.mxu0 0.0
    %1131 = vmatprep.subr.mxu0 0.0
    %1132 = vmatpush1.msra.mxu0 0.0
    %1133 = vmatprep.subr.mxu0 0.0
    %1134 = vmatpush1.msra.mxu0 0.0
    %1135 = vmatprep.subr.mxu0 0.0
    %1136 = vmatpush1.msra.mxu0 0.0
    %1137 = vmatprep.mubr.f32.mxu0 0.0
    %1138 = vmatmul.mubr.f32.gmra.mrb[0].mxu0 %v1063
    %v1139 = vpop.f32.mrb[0].mxu0
    %v1140 = vadd.f32 0.0, %v1139
    %v1141 = vpop.f32.mrb[0].mxu0
    %1142 = vdwg.mxu0
    %1143 = vmatprep.subr.mxu0 0.0
    %1144 = vmatpush1.msra.mxu0 %v85
    %1145 = vmatprep.subr.mxu0 0.0
    %1146 = vmatpush1.msra.mxu0 %v86
    %1147 = vmatprep.subr.mxu0 0.0
    %1148 = vmatpush1.msra.mxu0 %v87
    %1149 = vmatprep.subr.mxu0 0.0
    %1150 = vmatpush1.msra.mxu0 %v88
    %1151 = vmatprep.subr.mxu0 0.0
    %1152 = vmatpush1.msra.mxu0 %v89
    %1153 = vmatprep.subr.mxu0 0.0
    %1154 = vmatpush1.msra.mxu0 %v90
    %1155 = vmatprep.subr.mxu0 0.0
    %1156 = vmatpush1.msra.mxu0 %v91
    %1157 = vmatprep.subr.mxu0 0.0
    %1158 = vmatpush1.msra.mxu0 %v92
    %1159 = vmatprep.subr.mxu0 0.0
    %1160 = vmatpush1.msra.mxu0 %v93
    %1161 = vmatprep.subr.mxu0 0.0
    %1162 = vmatpush1.msra.mxu0 %v94
    %1163 = vmatprep.subr.mxu0 0.0
    %1164 = vmatpush1.msra.mxu0 %v95
    %1165 = vmatprep.subr.mxu0 0.0
    %1166 = vmatpush1.msra.mxu0 %v96
    %1167 = vmatprep.subr.mxu0 0.0
    %1168 = vmatpush1.msra.mxu0 %v97
    %1169 = vmatprep.subr.mxu0 0.0
    %1170 = vmatpush1.msra.mxu0 %v98
    %1171 = vmatprep.subr.mxu0 0.0
    %1172 = vmatpush1.msra.mxu0 %v99
    %1173 = vmatprep.subr.mxu0 0.0
    %1174 = vmatpush1.msra.mxu0 %v100
    %1175 = vmatprep.subr.mxu0 0.0
    %1176 = vmatpush1.msra.mxu0 0.0
    %1177 = vmatprep.subr.mxu0 0.0
    %1178 = vmatpush1.msra.mxu0 0.0
    %1179 = vmatprep.subr.mxu0 0.0
    %1180 = vmatpush1.msra.mxu0 0.0
    %1181 = vmatprep.subr.mxu0 0.0
    %1182 = vmatpush1.msra.mxu0 0.0
    %1183 = vmatprep.subr.mxu0 0.0
    %1184 = vmatpush1.msra.mxu0 0.0
    %1185 = vmatprep.subr.mxu0 0.0
    %1186 = vmatpush1.msra.mxu0 0.0
    %1187 = vmatprep.subr.mxu0 0.0
    %1188 = vmatpush1.msra.mxu0 0.0
    %1189 = vmatprep.subr.mxu0 0.0
    %1190 = vmatpush1.msra.mxu0 0.0
    %1191 = vmatprep.subr.mxu0 0.0
    %1192 = vmatpush1.msra.mxu0 0.0
    %1193 = vmatprep.subr.mxu0 0.0
    %1194 = vmatpush1.msra.mxu0 0.0
    %1195 = vmatprep.subr.mxu0 0.0
    %1196 = vmatpush1.msra.mxu0 0.0
    %1197 = vmatprep.subr.mxu0 0.0
    %1198 = vmatpush1.msra.mxu0 0.0
    %1199 = vmatprep.subr.mxu0 0.0
    %1200 = vmatpush1.msra.mxu0 0.0
    %1201 = vmatprep.subr.mxu0 0.0
    %1202 = vmatpush1.msra.mxu0 0.0
    %1203 = vmatprep.subr.mxu0 0.0
    %1204 = vmatpush1.msra.mxu0 0.0
    %1205 = vmatprep.subr.mxu0 0.0
    %1206 = vmatpush1.msra.mxu0 0.0
    %1207 = vmatprep.mubr.f32.mxu0 0.0
    %1208 = vmatmul.mubr.f32.gmra.mrb[0].mxu0 %v1072
    %v1209 = vpop.f32.mrb[0].mxu0
    %v1210 = vadd.f32 0.0, %v1209
    %v1211 = vpop.f32.mrb[0].mxu0
    %1212 = vdwg.mxu0
    %v1213 = vmul.f32 %v1140, %v1140
    %v1214 = vsub.f32 %v1210, %v1213
    %v1215 = vmax.f32 %v1214, 0.0
    %v1216 = vlaneseq
    %v1217 = vshrl.u32 %v1216, 7
    %v1218 = vsub.s32 0, %v1217
    %v1219 = vrot.slane %v1140, %v1218
    %v1220 = vsub.f32 %v1045, %v1219
    %v1221 = vsub.f32 %v1046, %v1219
    %v1222 = vsub.f32 %v1047, %v1219
    %v1223 = vsub.f32 %v1048, %v1219
    %v1224 = vadd.f32 %v1215, 1e-05
    %v1225 = vrsqrt.pop %v1224
    %v1226 = vmul.f32 %v1049, %v1225
    %v1228 = vlaneseq
    %v1229 = vshrl.u32 %v1228, 7
    %v1230 = vsub.s32 0, %v1229
    %v1231 = vrot.slane %v1226, %v1230
    %v1233 = vmul.f32 %v1220, %v1231
    %v1234 = vmul.f32 %v1221, %v1231
    %v1235 = vmul.f32 %v1222, %v1231
    %v1236 = vmul.f32 %v1223, %v1231
    %v1238 = vlaneseq
    %v1239 = vshrl.u32 %v1238, 7
    %v1240 = vsub.s32 0, %v1239
    %v1241 = vrot.slane %v1050, %v1240
    %v1243 = vadd.f32 %v1233, %v1241
    %v1244 = vadd.f32 %v1234, %v1241
    %v1245 = vadd.f32 %v1235, %v1241
    %v1246 = vadd.f32 %v1236, %v1241
    %v1247 = vmax.f32 %v1243, 0.0
    %v1248 = vmax.f32 %v1244, 0.0
    %v1249 = vmax.f32 %v1245, 0.0
    %v1250 = vmax.f32 %v1246, 0.0
    %1251 = vst [vmem:[#allocation10] sm:$0xff] %v1247
    %1252 = vst [vmem:[#allocation10 + $0x8] sm:$0xff] %v1248
    %1253 = vst [vmem:[#allocation10 + $0x10] sm:$0xff] %v1249
    %1254 = vst [vmem:[#allocation10 + $0x18] sm:$0xff] %v1250
    // Predicated region
    $region50: #{tpu_custom_call.1} parent=1 // pred_check
      _
    $region51: #{tpu_custom_call.1} parent=1 // pred_check_branch
      %1256 = sbr.rel (0) target = $region53
    $region52: #{tpu_custom_call.1} parent=1 // pred_region
      %s1258 = ssub.s32 512, 512
      %1259 = vsyncadd [#allocation4], %s1258
      %s1260 = sshll.u32 [#allocation10], 4
      %s1261 = int_to_ptr.vmem [resolvable:$true] %s1260
      %1266 = dma.vmem_to_hbm [thread:$0]  %s1261, 512, %s8, [#allocation4], 128, 128, 8
    $region53: #{tpu_custom_call.1} parent=1 // pred_fallthru
      _
    // Predicated region
    $region54: #{tpu_custom_call.1} parent=1 // pred_check
      _
    $region55: #{tpu_custom_call.1} parent=1 // pred_check_branch
      %1268 = sbr.rel (0) target = $region57
    $region56: #{tpu_custom_call.1} parent=1 // pred_region
      %1269 = dma.done [#allocation4], 512
    $region57: #{tpu_custom_call.1} parent=1 // pred_fallthru
      _
    %1270 = vsyncpa [#allocation3], 1
    %1271 = vsyncpa [#allocation6], 1
    %1272 = vsyncpa [#allocation9], 1
    %1273 = vsyncpa [#allocation4], 1

</llo_original>
